<compile_context>
chip_gen: v6e
topology: v6e:2x2x1
jax: 0.10.0
libtpu: 0.0.40
codegen_flags: <defaults>
</compile_context>

<pallas_src>
import functools
import math

import jax
import jax.numpy as jnp
from jax import lax
from jax.experimental import pallas as pl
from jax.experimental.pallas import tpu as pltpu

_LANE = 256      # lane-dim padding multiple (v6e/v7x MXU is 256 wide; fine on v5e)
_SUBLANE = 8     # f32 sublane multiple
_TB_CAP = 256    # max batch-tile rows (fills the MXU M dimension)


def _round_up(x, m):
    return ((x + m - 1) // m) * m


def _vmem_limit_bytes():
    """~75% of physical VMEM (128 MiB on v5e/v6e, 64 MiB on v7x), safe fallback."""
    try:
        cap = int(getattr(pltpu.get_tpu_info(), "vmem_capacity_bytes", 0) or 0)
        if cap > 0:
            return (cap * 3) // 4
    except Exception:
        pass
    return 48 * 1024 * 1024   # conservative: fits every generation


def _gqa_kernel(feat_ref, pos_ref, wf_ref, wp_ref, bpool_ref,
                w1_ref, b1_ref, gamma_ref, beta_ref, w2_ref, b2_ref,
                out_ref, *, ln_dim, inv_objects, approx_gelu):
    # ---- encoder stand-in: mean-pool objects (f32 accumulation), project, tanh
    pooled_f = jnp.sum(feat_ref[...].astype(jnp.float32), axis=1) * inv_objects  # (TB, F)
    pooled_p = jnp.sum(pos_ref[...].astype(jnp.float32), axis=1) * inv_objects   # (TB, P)

    acc = jnp.dot(pooled_f.astype(jnp.bfloat16), wf_ref[...],
                  preferred_element_type=jnp.float32)
    acc = acc + jnp.dot(pooled_p.astype(jnp.bfloat16), wp_ref[...],
                        preferred_element_type=jnp.float32)
    x = jnp.tanh(acc + bpool_ref[...])                       # (TB, HP); padded cols == 0

    # ---- logit_fc[0]: Linear(H -> 2H) ----
    h = (jnp.dot(x.astype(jnp.bfloat16), w1_ref[...],
                 preferred_element_type=jnp.float32)
         + b1_ref[...])                                       # (TB, H2P); padded cols == 0

    # ---- GeLU (exact erf form by default, as in LXMERT) ----
    if approx_gelu:
        h = jax.nn.gelu(h, approximate=True)                  # tanh form -> EUP (v5e)
    else:
        h = h * 0.5 * (1.0 + lax.erf(h * (1.0 / math.sqrt(2.0))))

    # ---- BertLayerNorm(2H, eps=1e-12) over the real ln_dim columns ----
    # Padded columns of h are exactly zero, so one-pass moments over the full
    # padded lane width equal the moments over the real columns (no mask).
    inv_n = 1.0 / ln_dim
    mu = jnp.sum(h, axis=-1, keepdims=True) * inv_n
    ex2 = jnp.sum(h * h, axis=-1, keepdims=True) * inv_n
    var = jnp.maximum(ex2 - mu * mu, 0.0)
    hn = (h - mu) * lax.rsqrt(var + 1e-12)
    hn = hn * gamma_ref[...] + beta_ref[...]                   # zero-padded gamma/beta

    # ---- logit_fc[3]: Linear(2H -> num_answers_padded), lane-dense store ----
    out_ref[...] = (
        jnp.dot(hn.astype(jnp.bfloat16), w2_ref[...],
                preferred_element_type=jnp.float32)
        + b2_ref[...]
    ).astype(out_ref.dtype)


@functools.partial(jax.jit, static_argnames=("approx_gelu", "single_buffer_weights"))
def _gqa_forward_impl(feat, pos, params, *, approx_gelu, single_buffer_weights):
    b, o, f = feat.shape
    p = pos.shape[-1]
    hid = params["wf"].shape[1]
    num_ans = params["w2"].shape[1]

    HP = _round_up(hid, _LANE)            # pooled-hidden, lane padded
    H2P = _round_up(2 * hid, _LANE)       # logit_fc hidden, lane padded
    AP = _round_up(num_ans, _LANE)        # answers, lane padded

    # ---- batch-tile sizing from a per-generation VMEM budget ----
    vmem_limit = _vmem_limit_bytes()
    bytes_per_row = (
        2 * o * (f + p) * 2               # bf16 feat+pos tiles, double-buffered
        + 2 * AP * 4                      # f32 output tile, double-buffered
        + (HP + 3 * H2P + AP) * 4         # f32 intermediates headroom
    )
    weight_bytes = ((f + p) * HP * 2 + HP * H2P * 2 + H2P * AP * 2   # bf16 weights
                    + (HP + 3 * H2P + AP) * 4)                        # f32 bias/LN rows
    budget = int(vmem_limit * 0.8) - 2 * weight_bytes   # worst case: dbl-buffered weights
    tb_cap = max(_SUBLANE,
                 min(_TB_CAP, (budget // max(bytes_per_row, 1)) // _SUBLANE * _SUBLANE))

    b8 = _round_up(b, _SUBLANE)
    n_tiles = pl.cdiv(b8, tb_cap)
    TB = _round_up(pl.cdiv(b8, n_tiles), _SUBLANE)   # balanced tiles (v7x 2-core split)
    b_pad = n_tiles * TB

    # ---- wrapper-side layout plumbing (pad / cast only; no concat round-trip) ----
    feat_bf = jnp.pad(feat.astype(jnp.bfloat16), ((0, b_pad - b), (0, 0), (0, 0)))
    pos_bf = jnp.pad(pos.astype(jnp.bfloat16), ((0, b_pad - b), (0, 0), (0, 0)))

    wf = jnp.pad(params["wf"], ((0, 0), (0, HP - hid))).astype(jnp.bfloat16)
    wp = jnp.pad(params["wp"], ((0, 0), (0, HP - hid))).astype(jnp.bfloat16)
    bpool = jnp.pad(params["bpool"], (0, HP - hid)).reshape(1, HP)

    w1 = jnp.pad(params["w1"],
                 ((0, HP - hid), (0, H2P - 2 * hid))).astype(jnp.bfloat16)
    b1 = jnp.pad(params["b1"], (0, H2P - 2 * hid)).reshape(1, H2P)
    gamma = jnp.pad(params["gamma"], (0, H2P - 2 * hid)).reshape(1, H2P)  # zero pad
    beta = jnp.pad(params["beta"], (0, H2P - 2 * hid)).reshape(1, H2P)

    w2 = jnp.pad(params["w2"],
                 ((0, H2P - 2 * hid), (0, AP - num_ans))).astype(jnp.bfloat16)
    b2 = jnp.pad(params["b2"], (0, AP - num_ans)).reshape(1, AP)

    buffering = pl.Buffered(1) if single_buffer_weights else None

    def wspec(shape):
        # Constant index_map -> DMA'd once, VMEM-resident across all grid steps.
        if buffering is None:
            return pl.BlockSpec(shape, lambda i: (0,) * len(shape))
        return pl.BlockSpec(shape, lambda i: (0,) * len(shape), pipeline_mode=buffering)

    kernel = functools.partial(_gqa_kernel, ln_dim=2 * hid,
                               inv_objects=1.0 / o, approx_gelu=approx_gelu)

    out = pl.pallas_call(
        kernel,
        out_shape=jax.ShapeDtypeStruct((b_pad, AP), jnp.float32),
        grid=(n_tiles,),
        in_specs=[
            # batch-tiled visual inputs (bf16, pipelined)
            pl.BlockSpec((TB, o, f), lambda i: (i, 0, 0)),
            pl.BlockSpec((TB, o, p), lambda i: (i, 0, 0)),
            # VMEM-resident weights / biases
            wspec((f, HP)),
            wspec((p, HP)),
            wspec((1, HP)),
            wspec((HP, H2P)),
            wspec((1, H2P)),
            wspec((1, H2P)),
            wspec((1, H2P)),
            wspec((H2P, AP)),
            wspec((1, AP)),
        ],
        out_specs=pl.BlockSpec((TB, AP), lambda i: (i, 0)),
        compiler_params=pltpu.CompilerParams(
            dimension_semantics=("parallel",),
            vmem_limit_bytes=vmem_limit,
        ),
    )(feat_bf, pos_bf, wf, wp, bpool, w1, b1, gamma, beta, w2, b2)

    return out[:b, :num_ans]


def gqa_forward(feat, pos, sent, params, *, approx_gelu=False):
    # `sent` (list of strings) accepted for API parity but unused:
    # TODO(synk): string tokenization / LXMERT text encoder has no Pallas equivalent.
    del sent
    try:
        return _gqa_forward_impl(feat, pos, params, approx_gelu=approx_gelu,
                                 single_buffer_weights=True)
    except Exception:
        # Fallback for jax builds where pipeline_mode=pl.Buffered(1) is not
        # accepted on the top-level pallas_call pipeline (costs only VMEM).
        return _gqa_forward_impl(feat, pos, params, approx_gelu=approx_gelu,
                                 single_buffer_weights=False)


def init_params(key, feat_dim=16, pos_dim=4, hid_dim=32, num_answers=16):
    # BERT-style init: normal(0, 0.02) for weights, zeros for biases,
    # ones/zeros for LayerNorm gamma/beta.
    ks = jax.random.split(key, 4)
    std = 0.02
    return {
        "wf":    std * jax.random.normal(ks[0], (feat_dim, hid_dim), jnp.float32),
        "wp":    std * jax.random.normal(ks[1], (pos_dim, hid_dim), jnp.float32),
        "bpool": jnp.zeros((hid_dim,), jnp.float32),
        "w1":    std * jax.random.normal(ks[2], (hid_dim, 2 * hid_dim), jnp.float32),
        "b1":    jnp.zeros((2 * hid_dim,), jnp.float32),
        "gamma": jnp.ones((2 * hid_dim,), jnp.float32),
        "beta":  jnp.zeros((2 * hid_dim,), jnp.float32),
        "w2":    std * jax.random.normal(ks[3], (2 * hid_dim, num_answers), jnp.float32),
        "b2":    jnp.zeros((num_answers,), jnp.float32),
    }


def _reference_forward(feat, pos, params):
    # Pure-JAX f32 reference of the implemented graph (same encoder stand-in).
    pooled = jnp.mean(jnp.concatenate([feat, pos], axis=-1), axis=1)
    wcat = jnp.concatenate([params["wf"], params["wp"]], axis=0)
    x = jnp.tanh(pooled @ wcat + params["bpool"])
    h = x @ params["w1"] + params["b1"]
    h = h * 0.5 * (1.0 + lax.erf(h * (1.0 / math.sqrt(2.0))))
    mu = jnp.mean(h, axis=-1, keepdims=True)
    var = jnp.mean((h - mu) ** 2, axis=-1, keepdims=True)
    hn = (h - mu) * lax.rsqrt(var + 1e-12) * params["gamma"] + params["beta"]
    return hn @ params["w2"] + params["b2"]


if __name__ == "__main__":
    key = jax.random.PRNGKey(0)
    k_feat, k_pos, k_param = jax.random.split(key, 3)

    B, O, F = 2, 8, 16        # batch, objects, visual feature size
    HID, NUM_ANS = 32, 16

    feat = jax.random.normal(k_feat, (B, O, F), jnp.float32)
    pos = jax.random.uniform(k_pos, (B, O, 4), jnp.float32)
    sent = ["what color is the ball?", "where is the dog?"]

    params = init_params(k_param, feat_dim=F, pos_dim=4,
                         hid_dim=HID, num_answers=NUM_ANS)

    logit = gqa_forward(feat, pos, sent, params)
    jax.block_until_ready(logit)
    assert logit.shape == (B, NUM_ANS)

    ref = _reference_forward(feat, pos, params)
    max_err = float(jnp.max(jnp.abs(logit - ref)))
    assert max_err < 3e-2, f"kernel/reference mismatch: max |err| = {max_err}"

    print("KERNEL_OK")
</pallas_src>

<mosaic_0001>
module attributes {stable_mosaic.version = 11 : i64} {
  func.func @_gqa_kernel(%arg0: i32, %arg1: memref<8x8x16xbf16, #tpu.memory_space<vmem>>, %arg2: memref<8x8x4xbf16, #tpu.memory_space<vmem>>, %arg3: memref<16x256xbf16, #tpu.memory_space<vmem>>, %arg4: memref<4x256xbf16, #tpu.memory_space<vmem>>, %arg5: memref<1x256xf32, #tpu.memory_space<vmem>>, %arg6: memref<256x256xbf16, #tpu.memory_space<vmem>>, %arg7: memref<1x256xf32, #tpu.memory_space<vmem>>, %arg8: memref<1x256xf32, #tpu.memory_space<vmem>>, %arg9: memref<1x256xf32, #tpu.memory_space<vmem>>, %arg10: memref<256x256xbf16, #tpu.memory_space<vmem>>, %arg11: memref<1x256xf32, #tpu.memory_space<vmem>>, %arg12: memref<8x256xf32, #tpu.memory_space<vmem>>) attributes {dimension_semantics = [#tpu.dimension_semantics<parallel>], iteration_bounds = array<i64: 1>, scalar_prefetch = 0 : i64, scratch_operands = 0 : i64, tpu.core_type = #tpu.core_type<tc>, window_params = [{transform_indices = @transform_0, window_bounds = array<i64: 8, 8, 16>}, {transform_indices = @transform_1, window_bounds = array<i64: 8, 8, 4>}, {pipeline_mode = #tpu.pipeline_mode<synchronous>, transform_indices = @transform_2, window_bounds = array<i64: 16, 256>}, {pipeline_mode = #tpu.pipeline_mode<synchronous>, transform_indices = @transform_3, window_bounds = array<i64: 4, 256>}, {pipeline_mode = #tpu.pipeline_mode<synchronous>, transform_indices = @transform_4, window_bounds = array<i64: 1, 256>}, {pipeline_mode = #tpu.pipeline_mode<synchronous>, transform_indices = @transform_5, window_bounds = array<i64: 256, 256>}, {pipeline_mode = #tpu.pipeline_mode<synchronous>, transform_indices = @transform_6, window_bounds = array<i64: 1, 256>}, {pipeline_mode = #tpu.pipeline_mode<synchronous>, transform_indices = @transform_7, window_bounds = array<i64: 1, 256>}, {pipeline_mode = #tpu.pipeline_mode<synchronous>, transform_indices = @transform_8, window_bounds = array<i64: 1, 256>}, {pipeline_mode = #tpu.pipeline_mode<synchronous>, transform_indices = @transform_9, window_bounds = array<i64: 256, 256>}, {pipeline_mode = #tpu.pipeline_mode<synchronous>, transform_indices = @transform_10, window_bounds = array<i64: 1, 256>}, {transform_indices = @transform_11, window_bounds = array<i64: 8, 256>}]} {
    %c0 = arith.constant 0 : index
    %c0_0 = arith.constant 0 : index
    %c0_1 = arith.constant 0 : index
    %0 = vector.load %arg1[%c0, %c0_0, %c0_1] : memref<8x8x16xbf16, #tpu.memory_space<vmem>>, vector<8x8x16xbf16>
    %1 = arith.extf %0 : vector<8x8x16xbf16> to vector<8x8x16xf32>
    %cst = arith.constant dense<0.000000e+00> : vector<8x16xf32>
    %2 = vector.multi_reduction <add>, %1, %cst [1] : vector<8x8x16xf32> to vector<8x16xf32>
    %cst_2 = arith.constant 1.250000e-01 : f32
    %3 = vector.broadcast %cst_2 : f32 to vector<8x16xf32>
    %4 = arith.mulf %2, %3 : vector<8x16xf32>
    %c0_3 = arith.constant 0 : index
    %c0_4 = arith.constant 0 : index
    %c0_5 = arith.constant 0 : index
    %5 = vector.load %arg2[%c0_3, %c0_4, %c0_5] : memref<8x8x4xbf16, #tpu.memory_space<vmem>>, vector<8x8x4xbf16>
    %6 = arith.extf %5 : vector<8x8x4xbf16> to vector<8x8x4xf32>
    %cst_6 = arith.constant dense<0.000000e+00> : vector<8x4xf32>
    %7 = vector.multi_reduction <add>, %6, %cst_6 [1] : vector<8x8x4xf32> to vector<8x4xf32>
    %cst_7 = arith.constant 1.250000e-01 : f32
    %8 = vector.broadcast %cst_7 : f32 to vector<8x4xf32>
    %9 = arith.mulf %7, %8 : vector<8x4xf32>
    %10 = arith.truncf %4 : vector<8x16xf32> to vector<8x16xbf16>
    %c0_8 = arith.constant 0 : index
    %c0_9 = arith.constant 0 : index
    %11 = vector.load %arg3[%c0_8, %c0_9] : memref<16x256xbf16, #tpu.memory_space<vmem>>, vector<16x256xbf16>
    %cst_10 = arith.constant dense<0.000000e+00> : vector<8x256xf32>
    %12 = tpu.matmul %10, %11, %cst_10 {dimension_numbers = #tpu.dot_dimension_numbers<[1], [0], [0], [1], [0, 0, 1, 1], [], []>} : vector<8x16xbf16>, vector<16x256xbf16>, vector<8x256xf32> -> vector<8x256xf32>
    %13 = arith.truncf %9 : vector<8x4xf32> to vector<8x4xbf16>
    %c0_11 = arith.constant 0 : index
    %c0_12 = arith.constant 0 : index
    %14 = vector.load %arg4[%c0_11, %c0_12] : memref<4x256xbf16, #tpu.memory_space<vmem>>, vector<4x256xbf16>
    %cst_13 = arith.constant dense<0.000000e+00> : vector<8x256xf32>
    %15 = tpu.matmul %13, %14, %cst_13 {dimension_numbers = #tpu.dot_dimension_numbers<[1], [0], [0], [1], [0, 0, 1, 1], [], []>} : vector<8x4xbf16>, vector<4x256xbf16>, vector<8x256xf32> -> vector<8x256xf32>
    %16 = arith.addf %12, %15 : vector<8x256xf32>
    %c0_14 = arith.constant 0 : index
    %c0_15 = arith.constant 0 : index
    %17 = vector.load %arg5[%c0_14, %c0_15] : memref<1x256xf32, #tpu.memory_space<vmem>>, vector<1x256xf32>
    %18 = vector.broadcast %17 : vector<1x256xf32> to vector<8x256xf32>
    %19 = arith.addf %16, %18 : vector<8x256xf32>
    %20 = math.tanh %19 : vector<8x256xf32>
    %21 = arith.truncf %20 : vector<8x256xf32> to vector<8x256xbf16>
    %c0_16 = arith.constant 0 : index
    %c0_17 = arith.constant 0 : index
    %22 = vector.load %arg6[%c0_16, %c0_17] : memref<256x256xbf16, #tpu.memory_space<vmem>>, vector<256x256xbf16>
    %cst_18 = arith.constant dense<0.000000e+00> : vector<8x256xf32>
    %23 = tpu.matmul %21, %22, %cst_18 {dimension_numbers = #tpu.dot_dimension_numbers<[1], [0], [0], [1], [0, 0, 1, 1], [], []>} : vector<8x256xbf16>, vector<256x256xbf16>, vector<8x256xf32> -> vector<8x256xf32>
    %c0_19 = arith.constant 0 : index
    %c0_20 = arith.constant 0 : index
    %24 = vector.load %arg7[%c0_19, %c0_20] : memref<1x256xf32, #tpu.memory_space<vmem>>, vector<1x256xf32>
    %25 = vector.broadcast %24 : vector<1x256xf32> to vector<8x256xf32>
    %26 = arith.addf %23, %25 : vector<8x256xf32>
    %cst_21 = arith.constant 5.000000e-01 : f32
    %27 = vector.broadcast %cst_21 : f32 to vector<8x256xf32>
    %28 = arith.mulf %26, %27 : vector<8x256xf32>
    %cst_22 = arith.constant 0.707106769 : f32
    %29 = vector.broadcast %cst_22 : f32 to vector<8x256xf32>
    %30 = arith.mulf %26, %29 : vector<8x256xf32>
    %31 = math.erf %30 : vector<8x256xf32>
    %cst_23 = arith.constant 1.000000e+00 : f32
    %32 = vector.broadcast %cst_23 : f32 to vector<8x256xf32>
    %33 = arith.addf %32, %31 : vector<8x256xf32>
    %34 = arith.mulf %28, %33 : vector<8x256xf32>
    %cst_24 = arith.constant dense<0.000000e+00> : vector<8xf32>
    %35 = vector.multi_reduction <add>, %34, %cst_24 [1] : vector<8x256xf32> to vector<8xf32>
    %36 = vector.shape_cast %35 : vector<8xf32> to vector<8x1xf32>
    %cst_25 = arith.constant 1.562500e-02 : f32
    %37 = vector.broadcast %cst_25 : f32 to vector<8x1xf32>
    %38 = arith.mulf %36, %37 : vector<8x1xf32>
    %39 = arith.mulf %34, %34 : vector<8x256xf32>
    %cst_26 = arith.constant dense<0.000000e+00> : vector<8xf32>
    %40 = vector.multi_reduction <add>, %39, %cst_26 [1] : vector<8x256xf32> to vector<8xf32>
    %41 = vector.shape_cast %40 : vector<8xf32> to vector<8x1xf32>
    %cst_27 = arith.constant 1.562500e-02 : f32
    %42 = vector.broadcast %cst_27 : f32 to vector<8x1xf32>
    %43 = arith.mulf %41, %42 : vector<8x1xf32>
    %44 = arith.mulf %38, %38 : vector<8x1xf32>
    %45 = arith.subf %43, %44 : vector<8x1xf32>
    %cst_28 = arith.constant 0.000000e+00 : f32
    %46 = vector.broadcast %cst_28 : f32 to vector<8x1xf32>
    %47 = arith.maximumf %45, %46 : vector<8x1xf32>
    %48 = vector.broadcast %38 : vector<8x1xf32> to vector<8x256xf32>
    %49 = arith.subf %34, %48 : vector<8x256xf32>
    %cst_29 = arith.constant 9.99999996E-13 : f32
    %50 = vector.broadcast %cst_29 : f32 to vector<8x1xf32>
    %51 = arith.addf %47, %50 : vector<8x1xf32>
    %52 = math.rsqrt %51 : vector<8x1xf32>
    %53 = vector.broadcast %52 : vector<8x1xf32> to vector<8x256xf32>
    %54 = arith.mulf %49, %53 : vector<8x256xf32>
    %c0_30 = arith.constant 0 : index
    %c0_31 = arith.constant 0 : index
    %55 = vector.load %arg8[%c0_30, %c0_31] : memref<1x256xf32, #tpu.memory_space<vmem>>, vector<1x256xf32>
    %56 = vector.broadcast %55 : vector<1x256xf32> to vector<8x256xf32>
    %57 = arith.mulf %54, %56 : vector<8x256xf32>
    %c0_32 = arith.constant 0 : index
    %c0_33 = arith.constant 0 : index
    %58 = vector.load %arg9[%c0_32, %c0_33] : memref<1x256xf32, #tpu.memory_space<vmem>>, vector<1x256xf32>
    %59 = vector.broadcast %58 : vector<1x256xf32> to vector<8x256xf32>
    %60 = arith.addf %57, %59 : vector<8x256xf32>
    %61 = arith.truncf %60 : vector<8x256xf32> to vector<8x256xbf16>
    %c0_34 = arith.constant 0 : index
    %c0_35 = arith.constant 0 : index
    %62 = vector.load %arg10[%c0_34, %c0_35] : memref<256x256xbf16, #tpu.memory_space<vmem>>, vector<256x256xbf16>
    %cst_36 = arith.constant dense<0.000000e+00> : vector<8x256xf32>
    %63 = tpu.matmul %61, %62, %cst_36 {dimension_numbers = #tpu.dot_dimension_numbers<[1], [0], [0], [1], [0, 0, 1, 1], [], []>} : vector<8x256xbf16>, vector<256x256xbf16>, vector<8x256xf32> -> vector<8x256xf32>
    %c0_37 = arith.constant 0 : index
    %c0_38 = arith.constant 0 : index
    %64 = vector.load %arg11[%c0_37, %c0_38] : memref<1x256xf32, #tpu.memory_space<vmem>>, vector<1x256xf32>
    %65 = vector.broadcast %64 : vector<1x256xf32> to vector<8x256xf32>
    %66 = arith.addf %63, %65 : vector<8x256xf32>
    %c0_39 = arith.constant 0 : index
    %c0_40 = arith.constant 0 : index
    %67 = vector.load %arg12[%c0_39, %c0_40] : memref<8x256xf32, #tpu.memory_space<vmem>>, vector<8x256xf32>
    tpu.vector_store %arg12[%c0_39, %c0_40], %66 {strides = array<i32>} : memref<8x256xf32, #tpu.memory_space<vmem>>, vector<8x256xf32>,
    return
  }
  func.func @transform_0(%arg0: i32) -> (i32, i32, i32) {
    %c0_i32 = arith.constant 0 : i32
    %c0_i32_0 = arith.constant 0 : i32
    %c0_i32_1 = arith.constant 0 : i32
    return %arg0, %c0_i32, %c0_i32_0 : i32, i32, i32
  }
  func.func @transform_1(%arg0: i32) -> (i32, i32, i32) {
    %c0_i32 = arith.constant 0 : i32
    %c0_i32_0 = arith.constant 0 : i32
    %c0_i32_1 = arith.constant 0 : i32
    return %arg0, %c0_i32, %c0_i32_0 : i32, i32, i32
  }
  func.func @transform_2(%arg0: i32) -> (i32, i32) {
    %c0_i32 = arith.constant 0 : i32
    %c0_i32_0 = arith.constant 0 : i32
    %c0_i32_1 = arith.constant 0 : i32
    return %c0_i32, %c0_i32_0 : i32, i32
  }
  func.func @transform_3(%arg0: i32) -> (i32, i32) {
    %c0_i32 = arith.constant 0 : i32
    %c0_i32_0 = arith.constant 0 : i32
    %c0_i32_1 = arith.constant 0 : i32
    return %c0_i32, %c0_i32_0 : i32, i32
  }
  func.func @transform_4(%arg0: i32) -> (i32, i32) {
    %c0_i32 = arith.constant 0 : i32
    %c0_i32_0 = arith.constant 0 : i32
    %c0_i32_1 = arith.constant 0 : i32
    return %c0_i32, %c0_i32_0 : i32, i32
  }
  func.func @transform_5(%arg0: i32) -> (i32, i32) {
    %c0_i32 = arith.constant 0 : i32
    %c0_i32_0 = arith.constant 0 : i32
    %c0_i32_1 = arith.constant 0 : i32
    return %c0_i32, %c0_i32_0 : i32, i32
  }
  func.func @transform_6(%arg0: i32) -> (i32, i32) {
    %c0_i32 = arith.constant 0 : i32
    %c0_i32_0 = arith.constant 0 : i32
    %c0_i32_1 = arith.constant 0 : i32
    return %c0_i32, %c0_i32_0 : i32, i32
  }
  func.func @transform_7(%arg0: i32) -> (i32, i32) {
    %c0_i32 = arith.constant 0 : i32
    %c0_i32_0 = arith.constant 0 : i32
    %c0_i32_1 = arith.constant 0 : i32
    return %c0_i32, %c0_i32_0 : i32, i32
  }
  func.func @transform_8(%arg0: i32) -> (i32, i32) {
    %c0_i32 = arith.constant 0 : i32
    %c0_i32_0 = arith.constant 0 : i32
    %c0_i32_1 = arith.constant 0 : i32
    return %c0_i32, %c0_i32_0 : i32, i32
  }
  func.func @transform_9(%arg0: i32) -> (i32, i32) {
    %c0_i32 = arith.constant 0 : i32
    %c0_i32_0 = arith.constant 0 : i32
    %c0_i32_1 = arith.constant 0 : i32
    return %c0_i32, %c0_i32_0 : i32, i32
  }
  func.func @transform_10(%arg0: i32) -> (i32, i32) {
    %c0_i32 = arith.constant 0 : i32
    %c0_i32_0 = arith.constant 0 : i32
    %c0_i32_1 = arith.constant 0 : i32
    return %c0_i32, %c0_i32_0 : i32, i32
  }
  func.func @transform_11(%arg0: i32) -> (i32, i32) {
    %c0_i32 = arith.constant 0 : i32
    %c0_i32_0 = arith.constant 0 : i32
    return %arg0, %c0_i32 : i32, i32
  }
}

module attributes {stable_mosaic.version = 11 : i64} {
  func.func @_gqa_kernel(%arg0: i32, %arg1: memref<8x8x16xbf16, #tpu.memory_space<vmem>>, %arg2: memref<8x8x4xbf16, #tpu.memory_space<vmem>>, %arg3: memref<16x256xbf16, #tpu.memory_space<vmem>>, %arg4: memref<4x256xbf16, #tpu.memory_space<vmem>>, %arg5: memref<1x256xf32, #tpu.memory_space<vmem>>, %arg6: memref<256x256xbf16, #tpu.memory_space<vmem>>, %arg7: memref<1x256xf32, #tpu.memory_space<vmem>>, %arg8: memref<1x256xf32, #tpu.memory_space<vmem>>, %arg9: memref<1x256xf32, #tpu.memory_space<vmem>>, %arg10: memref<256x256xbf16, #tpu.memory_space<vmem>>, %arg11: memref<1x256xf32, #tpu.memory_space<vmem>>, %arg12: memref<8x256xf32, #tpu.memory_space<vmem>>) attributes {dimension_semantics = [#tpu.dimension_semantics<parallel>], iteration_bounds = array<i64: 1>, scalar_prefetch = 0 : i64, scratch_operands = 0 : i64, tpu.core_type = #tpu.core_type<tc>, window_params = [{transform_indices = @transform_0, window_bounds = array<i64: 8, 8, 16>}, {transform_indices = @transform_1, window_bounds = array<i64: 8, 8, 4>}, {pipeline_mode = #tpu.pipeline_mode<synchronous>, transform_indices = @transform_2, window_bounds = array<i64: 16, 256>}, {pipeline_mode = #tpu.pipeline_mode<synchronous>, transform_indices = @transform_3, window_bounds = array<i64: 4, 256>}, {pipeline_mode = #tpu.pipeline_mode<synchronous>, transform_indices = @transform_4, window_bounds = array<i64: 1, 256>}, {pipeline_mode = #tpu.pipeline_mode<synchronous>, transform_indices = @transform_5, window_bounds = array<i64: 256, 256>}, {pipeline_mode = #tpu.pipeline_mode<synchronous>, transform_indices = @transform_6, window_bounds = array<i64: 1, 256>}, {pipeline_mode = #tpu.pipeline_mode<synchronous>, transform_indices = @transform_7, window_bounds = array<i64: 1, 256>}, {pipeline_mode = #tpu.pipeline_mode<synchronous>, transform_indices = @transform_8, window_bounds = array<i64: 1, 256>}, {pipeline_mode = #tpu.pipeline_mode<synchronous>, transform_indices = @transform_9, window_bounds = array<i64: 256, 256>}, {pipeline_mode = #tpu.pipeline_mode<synchronous>, transform_indices = @transform_10, window_bounds = array<i64: 1, 256>}, {transform_indices = @transform_11, window_bounds = array<i64: 8, 256>}]} {
    %c0 = arith.constant 0 : index
    %c0_0 = arith.constant 0 : index
    %c0_1 = arith.constant 0 : index
    %0 = vector.load %arg1[%c0, %c0_0, %c0_1] : memref<8x8x16xbf16, #tpu.memory_space<vmem>>, vector<8x8x16xbf16>
    %1 = arith.extf %0 : vector<8x8x16xbf16> to vector<8x8x16xf32>
    %cst = arith.constant dense<0.000000e+00> : vector<8x16xf32>
    %2 = vector.multi_reduction <add>, %1, %cst [1] : vector<8x8x16xf32> to vector<8x16xf32>
    %cst_2 = arith.constant 1.250000e-01 : f32
    %3 = vector.broadcast %cst_2 : f32 to vector<8x16xf32>
    %4 = arith.mulf %2, %3 : vector<8x16xf32>
    %c0_3 = arith.constant 0 : index
    %c0_4 = arith.constant 0 : index
    %c0_5 = arith.constant 0 : index
    %5 = vector.load %arg2[%c0_3, %c0_4, %c0_5] : memref<8x8x4xbf16, #tpu.memory_space<vmem>>, vector<8x8x4xbf16>
    %6 = arith.extf %5 : vector<8x8x4xbf16> to vector<8x8x4xf32>
    %cst_6 = arith.constant dense<0.000000e+00> : vector<8x4xf32>
    %7 = vector.multi_reduction <add>, %6, %cst_6 [1] : vector<8x8x4xf32> to vector<8x4xf32>
    %cst_7 = arith.constant 1.250000e-01 : f32
    %8 = vector.broadcast %cst_7 : f32 to vector<8x4xf32>
    %9 = arith.mulf %7, %8 : vector<8x4xf32>
    %10 = arith.truncf %4 : vector<8x16xf32> to vector<8x16xbf16>
    %c0_8 = arith.constant 0 : index
    %c0_9 = arith.constant 0 : index
    %11 = vector.load %arg3[%c0_8, %c0_9] : memref<16x256xbf16, #tpu.memory_space<vmem>>, vector<16x256xbf16>
    %cst_10 = arith.constant dense<0.000000e+00> : vector<8x256xf32>
    %12 = tpu.matmul %10, %11, %cst_10 {dimension_numbers = #tpu.dot_dimension_numbers<[1], [0], [0], [1], [0, 0, 1, 1], [], []>} : vector<8x16xbf16>, vector<16x256xbf16>, vector<8x256xf32> -> vector<8x256xf32>
    %13 = arith.truncf %9 : vector<8x4xf32> to vector<8x4xbf16>
    %c0_11 = arith.constant 0 : index
    %c0_12 = arith.constant 0 : index
    %14 = vector.load %arg4[%c0_11, %c0_12] : memref<4x256xbf16, #tpu.memory_space<vmem>>, vector<4x256xbf16>
    %cst_13 = arith.constant dense<0.000000e+00> : vector<8x256xf32>
    %15 = tpu.matmul %13, %14, %cst_13 {dimension_numbers = #tpu.dot_dimension_numbers<[1], [0], [0], [1], [0, 0, 1, 1], [], []>} : vector<8x4xbf16>, vector<4x256xbf16>, vector<8x256xf32> -> vector<8x256xf32>
    %16 = arith.addf %12, %15 : vector<8x256xf32>
    %c0_14 = arith.constant 0 : index
    %c0_15 = arith.constant 0 : index
    %17 = vector.load %arg5[%c0_14, %c0_15] : memref<1x256xf32, #tpu.memory_space<vmem>>, vector<1x256xf32>
    %18 = vector.broadcast %17 : vector<1x256xf32> to vector<8x256xf32>
    %19 = arith.addf %16, %18 : vector<8x256xf32>
    %20 = math.tanh %19 : vector<8x256xf32>
    %21 = arith.truncf %20 : vector<8x256xf32> to vector<8x256xbf16>
    %c0_16 = arith.constant 0 : index
    %c0_17 = arith.constant 0 : index
    %22 = vector.load %arg6[%c0_16, %c0_17] : memref<256x256xbf16, #tpu.memory_space<vmem>>, vector<256x256xbf16>
    %cst_18 = arith.constant dense<0.000000e+00> : vector<8x256xf32>
    %23 = tpu.matmul %21, %22, %cst_18 {dimension_numbers = #tpu.dot_dimension_numbers<[1], [0], [0], [1], [0, 0, 1, 1], [], []>} : vector<8x256xbf16>, vector<256x256xbf16>, vector<8x256xf32> -> vector<8x256xf32>
    %c0_19 = arith.constant 0 : index
    %c0_20 = arith.constant 0 : index
    %24 = vector.load %arg7[%c0_19, %c0_20] : memref<1x256xf32, #tpu.memory_space<vmem>>, vector<1x256xf32>
    %25 = vector.broadcast %24 : vector<1x256xf32> to vector<8x256xf32>
    %26 = arith.addf %23, %25 : vector<8x256xf32>
    %cst_21 = arith.constant 5.000000e-01 : f32
    %27 = vector.broadcast %cst_21 : f32 to vector<8x256xf32>
    %28 = arith.mulf %26, %27 : vector<8x256xf32>
    %cst_22 = arith.constant 0.707106769 : f32
    %29 = vector.broadcast %cst_22 : f32 to vector<8x256xf32>
    %30 = arith.mulf %26, %29 : vector<8x256xf32>
    %31 = math.erf %30 : vector<8x256xf32>
    %cst_23 = arith.constant 1.000000e+00 : f32
    %32 = vector.broadcast %cst_23 : f32 to vector<8x256xf32>
    %33 = arith.addf %32, %31 : vector<8x256xf32>
    %34 = arith.mulf %28, %33 : vector<8x256xf32>
    %cst_24 = arith.constant dense<0.000000e+00> : vector<8xf32>
    %35 = vector.multi_reduction <add>, %34, %cst_24 [1] : vector<8x256xf32> to vector<8xf32>
    %36 = vector.shape_cast %35 : vector<8xf32> to vector<8x1xf32>
    %cst_25 = arith.constant 1.562500e-02 : f32
    %37 = vector.broadcast %cst_25 : f32 to vector<8x1xf32>
    %38 = arith.mulf %36, %37 : vector<8x1xf32>
    %39 = arith.mulf %34, %34 : vector<8x256xf32>
    %cst_26 = arith.constant dense<0.000000e+00> : vector<8xf32>
    %40 = vector.multi_reduction <add>, %39, %cst_26 [1] : vector<8x256xf32> to vector<8xf32>
    %41 = vector.shape_cast %40 : vector<8xf32> to vector<8x1xf32>
    %cst_27 = arith.constant 1.562500e-02 : f32
    %42 = vector.broadcast %cst_27 : f32 to vector<8x1xf32>
    %43 = arith.mulf %41, %42 : vector<8x1xf32>
    %44 = arith.mulf %38, %38 : vector<8x1xf32>
    %45 = arith.subf %43, %44 : vector<8x1xf32>
    %cst_28 = arith.constant 0.000000e+00 : f32
    %46 = vector.broadcast %cst_28 : f32 to vector<8x1xf32>
    %47 = arith.maximumf %45, %46 : vector<8x1xf32>
    %48 = vector.broadcast %38 : vector<8x1xf32> to vector<8x256xf32>
    %49 = arith.subf %34, %48 : vector<8x256xf32>
    %cst_29 = arith.constant 9.99999996E-13 : f32
    %50 = vector.broadcast %cst_29 : f32 to vector<8x1xf32>
    %51 = arith.addf %47, %50 : vector<8x1xf32>
    %52 = math.rsqrt %51 : vector<8x1xf32>
    %53 = vector.broadcast %52 : vector<8x1xf32> to vector<8x256xf32>
    %54 = arith.mulf %49, %53 : vector<8x256xf32>
    %c0_30 = arith.constant 0 : index
    %c0_31 = arith.constant 0 : index
    %55 = vector.load %arg8[%c0_30, %c0_31] : memref<1x256xf32, #tpu.memory_space<vmem>>, vector<1x256xf32>
    %56 = vector.broadcast %55 : vector<1x256xf32> to vector<8x256xf32>
    %57 = arith.mulf %54, %56 : vector<8x256xf32>
    %c0_32 = arith.constant 0 : index
    %c0_33 = arith.constant 0 : index
    %58 = vector.load %arg9[%c0_32, %c0_33] : memref<1x256xf32, #tpu.memory_space<vmem>>, vector<1x256xf32>
    %59 = vector.broadcast %58 : vector<1x256xf32> to vector<8x256xf32>
    %60 = arith.addf %57, %59 : vector<8x256xf32>
    %61 = arith.truncf %60 : vector<8x256xf32> to vector<8x256xbf16>
    %c0_34 = arith.constant 0 : index
    %c0_35 = arith.constant 0 : index
    %62 = vector.load %arg10[%c0_34, %c0_35] : memref<256x256xbf16, #tpu.memory_space<vmem>>, vector<256x256xbf16>
    %cst_36 = arith.constant dense<0.000000e+00> : vector<8x256xf32>
    %63 = tpu.matmul %61, %62, %cst_36 {dimension_numbers = #tpu.dot_dimension_numbers<[1], [0], [0], [1], [0, 0, 1, 1], [], []>} : vector<8x256xbf16>, vector<256x256xbf16>, vector<8x256xf32> -> vector<8x256xf32>
    %c0_37 = arith.constant 0 : index
    %c0_38 = arith.constant 0 : index
    %64 = vector.load %arg11[%c0_37, %c0_38] : memref<1x256xf32, #tpu.memory_space<vmem>>, vector<1x256xf32>
    %65 = vector.broadcast %64 : vector<1x256xf32> to vector<8x256xf32>
    %66 = arith.addf %63, %65 : vector<8x256xf32>
    %c0_39 = arith.constant 0 : index
    %c0_40 = arith.constant 0 : index
    %67 = vector.load %arg12[%c0_39, %c0_40] : memref<8x256xf32, #tpu.memory_space<vmem>>, vector<8x256xf32>
    tpu.vector_store %arg12[%c0_39, %c0_40], %66 {strides = array<i32>} : memref<8x256xf32, #tpu.memory_space<vmem>>, vector<8x256xf32>,
    return
  }
  func.func @transform_0(%arg0: i32) -> (i32, i32, i32) {
    %c0_i32 = arith.constant 0 : i32
    %c0_i32_0 = arith.constant 0 : i32
    %c0_i32_1 = arith.constant 0 : i32
    return %arg0, %c0_i32, %c0_i32_0 : i32, i32, i32
  }
  func.func @transform_1(%arg0: i32) -> (i32, i32, i32) {
    %c0_i32 = arith.constant 0 : i32
    %c0_i32_0 = arith.constant 0 : i32
    %c0_i32_1 = arith.constant 0 : i32
    return %arg0, %c0_i32, %c0_i32_0 : i32, i32, i32
  }
  func.func @transform_2(%arg0: i32) -> (i32, i32) {
    %c0_i32 = arith.constant 0 : i32
    %c0_i32_0 = arith.constant 0 : i32
    %c0_i32_1 = arith.constant 0 : i32
    return %c0_i32, %c0_i32_0 : i32, i32
  }
  func.func @transform_3(%arg0: i32) -> (i32, i32) {
    %c0_i32 = arith.constant 0 : i32
    %c0_i32_0 = arith.constant 0 : i32
    %c0_i32_1 = arith.constant 0 : i32
    return %c0_i32, %c0_i32_0 : i32, i32
  }
  func.func @transform_4(%arg0: i32) -> (i32, i32) {
    %c0_i32 = arith.constant 0 : i32
    %c0_i32_0 = arith.constant 0 : i32
    %c0_i32_1 = arith.constant 0 : i32
    return %c0_i32, %c0_i32_0 : i32, i32
  }
  func.func @transform_5(%arg0: i32) -> (i32, i32) {
    %c0_i32 = arith.constant 0 : i32
    %c0_i32_0 = arith.constant 0 : i32
    %c0_i32_1 = arith.constant 0 : i32
    return %c0_i32, %c0_i32_0 : i32, i32
  }
  func.func @transform_6(%arg0: i32) -> (i32, i32) {
    %c0_i32 = arith.constant 0 : i32
    %c0_i32_0 = arith.constant 0 : i32
    %c0_i32_1 = arith.constant 0 : i32
    return %c0_i32, %c0_i32_0 : i32, i32
  }
  func.func @transform_7(%arg0: i32) -> (i32, i32) {
    %c0_i32 = arith.constant 0 : i32
    %c0_i32_0 = arith.constant 0 : i32
    %c0_i32_1 = arith.constant 0 : i32
    return %c0_i32, %c0_i32_0 : i32, i32
  }
  func.func @transform_8(%arg0: i32) -> (i32, i32) {
    %c0_i32 = arith.constant 0 : i32
    %c0_i32_0 = arith.constant 0 : i32
    %c0_i32_1 = arith.constant 0 : i32
    return %c0_i32, %c0_i32_0 : i32, i32
  }
  func.func @transform_9(%arg0: i32) -> (i32, i32) {
    %c0_i32 = arith.constant 0 : i32
    %c0_i32_0 = arith.constant 0 : i32
    %c0_i32_1 = arith.constant 0 : i32
    return %c0_i32, %c0_i32_0 : i32, i32
  }
  func.func @transform_10(%arg0: i32) -> (i32, i32) {
    %c0_i32 = arith.constant 0 : i32
    %c0_i32_0 = arith.constant 0 : i32
    %c0_i32_1 = arith.constant 0 : i32
    return %c0_i32, %c0_i32_0 : i32, i32
  }
  func.func @transform_11(%arg0: i32) -> (i32, i32) {
    %c0_i32 = arith.constant 0 : i32
    %c0_i32_0 = arith.constant 0 : i32
    return %arg0, %c0_i32 : i32, i32
  }
}

</mosaic_0001>

<llo_original>
// kernel: _gqa_forward_impl.1
$region0: #{_gqa_forward_impl.1}
  #allocation0 [shape = 'u32[]', space=smem, size = 0x4, offset = 0x4, fixed_abs, tag = 'smem constant byte address 0x4 - core index']
  #allocation1 [shape = 'u32[144,128]{1,0:T(1,128)}', space=vmem, size = 0x12000, scoped, tag = 'internal scratch']
  %s0 = inlined_call_operand.vmem [shape: bf16[8,8,16], index: 0, kind: input, shape index: {}]
  %s1 = inlined_call_operand.vmem [shape: bf16[8,8,4], index: 1, kind: input, shape index: {}]
  %s2 = inlined_call_operand.vmem [shape: bf16[16,256], index: 2, kind: input, shape index: {}]
  %s3 = inlined_call_operand.vmem [shape: bf16[4,256], index: 3, kind: input, shape index: {}]
  %s4 = inlined_call_operand.vmem [shape: f32[1,256], index: 4, kind: input, shape index: {}]
  %s5 = inlined_call_operand.vmem [shape: bf16[256,256], index: 5, kind: input, shape index: {}]
  %s6 = inlined_call_operand.vmem [shape: f32[1,256], index: 6, kind: input, shape index: {}]
  %s7 = inlined_call_operand.vmem [shape: f32[1,256], index: 7, kind: input, shape index: {}]
  %s8 = inlined_call_operand.vmem [shape: f32[1,256], index: 8, kind: input, shape index: {}]
  %s9 = inlined_call_operand.vmem [shape: bf16[256,256], index: 9, kind: input, shape index: {}]
  %s10 = inlined_call_operand.vmem [shape: f32[1,256], index: 10, kind: input, shape index: {}]
  %s11 = inlined_call_operand.vmem [shape: f32[8,256], index: 11, kind: output, shape index: {}]
  %s12 = sld [smem:[#allocation0]]
  $region54: #{_gqa_forward_impl.1} parent=0
    _
  %s14 = ssub.s32 1, %s12
  %s15 = scalar_select 0, %s14, %s12
  // Predicated region
  $region2: #{_gqa_forward_impl.1} parent=0 // pred_check
    _
  $region3: #{_gqa_forward_impl.1} parent=0 // pred_check_branch
    %17 = sbr.rel (0) target = $region5
  $region4: #{_gqa_forward_impl.1} parent=0 // pred_region
    _
  $region5: #{_gqa_forward_impl.1} parent=0 // pred_fallthru
    _
  // Predicated region
  $region6: #{_gqa_forward_impl.1} parent=0 // pred_check
    _
  $region7: #{_gqa_forward_impl.1} parent=0 // pred_check_branch
    %19 = sbr.rel (0) target = $region9
  $region8: #{_gqa_forward_impl.1} parent=0 // pred_region
    _
  $region9: #{_gqa_forward_impl.1} parent=0 // pred_fallthru
    _
  // Predicated region
  $region10: #{_gqa_forward_impl.1} parent=0 // pred_check
    _
  $region11: #{_gqa_forward_impl.1} parent=0 // pred_check_branch
    %21 = sbr.rel (0) target = $region13
  $region12: #{_gqa_forward_impl.1} parent=0 // pred_region
    _
  $region13: #{_gqa_forward_impl.1} parent=0 // pred_fallthru
    _
  // Predicated region
  $region14: #{_gqa_forward_impl.1} parent=0 // pred_check
    _
  $region15: #{_gqa_forward_impl.1} parent=0 // pred_check_branch
    %23 = sbr.rel (0) target = $region17
  $region16: #{_gqa_forward_impl.1} parent=0 // pred_region
    _
  $region17: #{_gqa_forward_impl.1} parent=0 // pred_fallthru
    _
  // Predicated region
  $region18: #{_gqa_forward_impl.1} parent=0 // pred_check
    _
  $region19: #{_gqa_forward_impl.1} parent=0 // pred_check_branch
    %25 = sbr.rel (0) target = $region21
  $region20: #{_gqa_forward_impl.1} parent=0 // pred_region
    _
  $region21: #{_gqa_forward_impl.1} parent=0 // pred_fallthru
    _
  // Predicated region
  $region22: #{_gqa_forward_impl.1} parent=0 // pred_check
    _
  $region23: #{_gqa_forward_impl.1} parent=0 // pred_check_branch
    %27 = sbr.rel (0) target = $region25
  $region24: #{_gqa_forward_impl.1} parent=0 // pred_region
    _
  $region25: #{_gqa_forward_impl.1} parent=0 // pred_fallthru
    _
  // Predicated region
  $region26: #{_gqa_forward_impl.1} parent=0 // pred_check
    _
  $region27: #{_gqa_forward_impl.1} parent=0 // pred_check_branch
    %29 = sbr.rel (0) target = $region29
  $region28: #{_gqa_forward_impl.1} parent=0 // pred_region
    _
  $region29: #{_gqa_forward_impl.1} parent=0 // pred_fallthru
    _
  // Predicated region
  $region30: #{_gqa_forward_impl.1} parent=0 // pred_check
    _
  $region31: #{_gqa_forward_impl.1} parent=0 // pred_check_branch
    %31 = sbr.rel (0) target = $region33
  $region32: #{_gqa_forward_impl.1} parent=0 // pred_region
    _
  $region33: #{_gqa_forward_impl.1} parent=0 // pred_fallthru
    _
  // Predicated region
  $region34: #{_gqa_forward_impl.1} parent=0 // pred_check
    _
  $region35: #{_gqa_forward_impl.1} parent=0 // pred_check_branch
    %33 = sbr.rel (0) target = $region37
  $region36: #{_gqa_forward_impl.1} parent=0 // pred_region
    _
  $region37: #{_gqa_forward_impl.1} parent=0 // pred_fallthru
    _
  // Predicated region
  $region38: #{_gqa_forward_impl.1} parent=0 // pred_check
    _
  $region39: #{_gqa_forward_impl.1} parent=0 // pred_check_branch
    %35 = sbr.rel (0) target = $region41
  $region40: #{_gqa_forward_impl.1} parent=0 // pred_region
    _
  $region41: #{_gqa_forward_impl.1} parent=0 // pred_fallthru
    _
  // Predicated region
  $region42: #{_gqa_forward_impl.1} parent=0 // pred_check
    _
  $region43: #{_gqa_forward_impl.1} parent=0 // pred_check_branch
    %37 = sbr.rel (0) target = $region45
  $region44: #{_gqa_forward_impl.1} parent=0 // pred_region
    _
  $region45: #{_gqa_forward_impl.1} parent=0 // pred_fallthru
    _
  %v39 = vld [vmem:[%s0] sm:$0xf]
  %v40 = vld [vmem:[%s0 + $0x4] sm:$0xf]
  %v41 = vld [vmem:[%s0 + $0x8] sm:$0xf]
  %v42 = vld [vmem:[%s0 + $0xc] sm:$0xf]
  %v43 = vld [vmem:[%s0 + $0x10] sm:$0xf]
  %v44 = vld [vmem:[%s0 + $0x14] sm:$0xf]
  %v45 = vld [vmem:[%s0 + $0x18] sm:$0xf]
  %v46 = vld [vmem:[%s0 + $0x1c] sm:$0xf]
  %v47 = vunpack.c.l.bf16 %v39
  %v48 = vunpack.c.l.bf16 %v40
  %v49 = vunpack.c.l.bf16 %v41
  %v50 = vunpack.c.l.bf16 %v42
  %v51 = vunpack.c.l.bf16 %v43
  %v52 = vunpack.c.l.bf16 %v44
  %v53 = vunpack.c.l.bf16 %v45
  %v54 = vunpack.c.l.bf16 %v46
  %vm55 = vcmask 130048
  %v56 = vsel %vm55, %v47, 0.0
  %v57 = vrot.slane %v56, 4
  %v58 = vadd.f32 %v56, %v57
  %v59 = vrot.slane %v58, 2
  %v60 = vadd.f32 %v58, %v59
  %v61 = vrot.slane %v60, 1
  %v62 = vadd.f32 %v60, %v61
  %v63 = vsel %vm55, %v48, 0.0
  %v64 = vrot.slane %v63, 4
  %v65 = vadd.f32 %v63, %v64
  %v66 = vrot.slane %v65, 2
  %v67 = vadd.f32 %v65, %v66
  %v68 = vrot.slane %v67, 1
  %v69 = vadd.f32 %v67, %v68
  %v70 = vsel %vm55, %v49, 0.0
  %v71 = vrot.slane %v70, 4
  %v72 = vadd.f32 %v70, %v71
  %v73 = vrot.slane %v72, 2
  %v74 = vadd.f32 %v72, %v73
  %v75 = vrot.slane %v74, 1
  %v76 = vadd.f32 %v74, %v75
  %v77 = vsel %vm55, %v50, 0.0
  %v78 = vrot.slane %v77, 4
  %v79 = vadd.f32 %v77, %v78
  %v80 = vrot.slane %v79, 2
  %v81 = vadd.f32 %v79, %v80
  %v82 = vrot.slane %v81, 1
  %v83 = vadd.f32 %v81, %v82
  %v84 = vsel %vm55, %v51, 0.0
  %v85 = vrot.slane %v84, 4
  %v86 = vadd.f32 %v84, %v85
  %v87 = vrot.slane %v86, 2
  %v88 = vadd.f32 %v86, %v87
  %v89 = vrot.slane %v88, 1
  %v90 = vadd.f32 %v88, %v89
  %v91 = vsel %vm55, %v52, 0.0
  %v92 = vrot.slane %v91, 4
  %v93 = vadd.f32 %v91, %v92
  %v94 = vrot.slane %v93, 2
  %v95 = vadd.f32 %v93, %v94
  %v96 = vrot.slane %v95, 1
  %v97 = vadd.f32 %v95, %v96
  %v98 = vsel %vm55, %v53, 0.0
  %v99 = vrot.slane %v98, 4
  %v100 = vadd.f32 %v98, %v99
  %v101 = vrot.slane %v100, 2
  %v102 = vadd.f32 %v100, %v101
  %v103 = vrot.slane %v102, 1
  %v104 = vadd.f32 %v102, %v103
  %v105 = vsel %vm55, %v54, 0.0
  %v106 = vrot.slane %v105, 4
  %v107 = vadd.f32 %v105, %v106
  %v108 = vrot.slane %v107, 2
  %v109 = vadd.f32 %v107, %v108
  %v110 = vrot.slane %v109, 1
  %v111 = vadd.f32 %v109, %v110
  %v112 = vmul.f32 %v62, 0.125
  %v113 = vmul.f32 %v69, 0.125
  %v114 = vmul.f32 %v76, 0.125
  %v115 = vmul.f32 %v83, 0.125
  %v116 = vmul.f32 %v90, 0.125
  %v117 = vmul.f32 %v97, 0.125
  %v118 = vmul.f32 %v104, 0.125
  %v119 = vmul.f32 %v111, 0.125
  %v120 = vld [vmem:[%s1] sm:$0xf]
  %v121 = vld [vmem:[%s1 + $0x4] sm:$0xf]
  %v122 = vld [vmem:[%s1 + $0x8] sm:$0xf]
  %v123 = vld [vmem:[%s1 + $0xc] sm:$0xf]
  %v124 = vld [vmem:[%s1 + $0x10] sm:$0xf]
  %v125 = vld [vmem:[%s1 + $0x14] sm:$0xf]
  %v126 = vld [vmem:[%s1 + $0x18] sm:$0xf]
  %v127 = vld [vmem:[%s1 + $0x1c] sm:$0xf]
  %v128 = vunpack.c.l.bf16 %v120
  %v129 = vunpack.c.l.bf16 %v121
  %v130 = vunpack.c.l.bf16 %v122
  %v131 = vunpack.c.l.bf16 %v123
  %v132 = vunpack.c.l.bf16 %v124
  %v133 = vunpack.c.l.bf16 %v125
  %v134 = vunpack.c.l.bf16 %v126
  %v135 = vunpack.c.l.bf16 %v127
  %vm136 = vcmask 31744
  %v137 = vsel %vm136, %v128, 0.0
  %v138 = vrot.slane %v137, 4
  %v139 = vadd.f32 %v137, %v138
  %v140 = vrot.slane %v139, 2
  %v141 = vadd.f32 %v139, %v140
  %v142 = vrot.slane %v141, 1
  %v143 = vadd.f32 %v141, %v142
  %v144 = vsel %vm136, %v129, 0.0
  %v145 = vrot.slane %v144, 4
  %v146 = vadd.f32 %v144, %v145
  %v147 = vrot.slane %v146, 2
  %v148 = vadd.f32 %v146, %v147
  %v149 = vrot.slane %v148, 1
  %v150 = vadd.f32 %v148, %v149
  %v151 = vsel %vm136, %v130, 0.0
  %v152 = vrot.slane %v151, 4
  %v153 = vadd.f32 %v151, %v152
  %v154 = vrot.slane %v153, 2
  %v155 = vadd.f32 %v153, %v154
  %v156 = vrot.slane %v155, 1
  %v157 = vadd.f32 %v155, %v156
  %v158 = vsel %vm136, %v131, 0.0
  %v159 = vrot.slane %v158, 4
  %v160 = vadd.f32 %v158, %v159
  %v161 = vrot.slane %v160, 2
  %v162 = vadd.f32 %v160, %v161
  %v163 = vrot.slane %v162, 1
  %v164 = vadd.f32 %v162, %v163
  %v165 = vsel %vm136, %v132, 0.0
  %v166 = vrot.slane %v165, 4
  %v167 = vadd.f32 %v165, %v166
  %v168 = vrot.slane %v167, 2
  %v169 = vadd.f32 %v167, %v168
  %v170 = vrot.slane %v169, 1
  %v171 = vadd.f32 %v169, %v170
  %v172 = vsel %vm136, %v133, 0.0
  %v173 = vrot.slane %v172, 4
  %v174 = vadd.f32 %v172, %v173
  %v175 = vrot.slane %v174, 2
  %v176 = vadd.f32 %v174, %v175
  %v177 = vrot.slane %v176, 1
  %v178 = vadd.f32 %v176, %v177
  %v179 = vsel %vm136, %v134, 0.0
  %v180 = vrot.slane %v179, 4
  %v181 = vadd.f32 %v179, %v180
  %v182 = vrot.slane %v181, 2
  %v183 = vadd.f32 %v181, %v182
  %v184 = vrot.slane %v183, 1
  %v185 = vadd.f32 %v183, %v184
  %v186 = vsel %vm136, %v135, 0.0
  %v187 = vrot.slane %v186, 4
  %v188 = vadd.f32 %v186, %v187
  %v189 = vrot.slane %v188, 2
  %v190 = vadd.f32 %v188, %v189
  %v191 = vrot.slane %v190, 1
  %v192 = vadd.f32 %v190, %v191
  %v193 = vmul.f32 %v143, 0.125
  %v194 = vmul.f32 %v150, 0.125
  %v195 = vmul.f32 %v157, 0.125
  %v196 = vmul.f32 %v164, 0.125
  %v197 = vmul.f32 %v171, 0.125
  %v198 = vmul.f32 %v178, 0.125
  %v199 = vmul.f32 %v185, 0.125
  %v200 = vmul.f32 %v192, 0.125
  %v201 = vpack.c.bf16 %v112, %v112
  %v202 = vpack.c.bf16 %v113, %v113
  %v203 = vpack.c.bf16 %v114, %v114
  %v204 = vpack.c.bf16 %v115, %v115
  %v205 = vpack.c.bf16 %v116, %v116
  %v206 = vpack.c.bf16 %v117, %v117
  %v207 = vpack.c.bf16 %v118, %v118
  %v208 = vpack.c.bf16 %v119, %v119
  %v209 = vld [vmem:[%s2] sm:$0xff]
  %v210 = vld [vmem:[%s2 + $0x8] sm:$0xff]
  %v211 = vpack.c.bf16 %v193, %v193
  %v212 = vpack.c.bf16 %v194, %v194
  %v213 = vpack.c.bf16 %v195, %v195
  %v214 = vpack.c.bf16 %v196, %v196
  %v215 = vpack.c.bf16 %v197, %v197
  %v216 = vpack.c.bf16 %v198, %v198
  %v217 = vpack.c.bf16 %v199, %v199
  %v218 = vpack.c.bf16 %v200, %v200
  %v219 = vld [vmem:[%s3] sm:$0xf]
  %v228 = vunpack.c.l.b16 %v211
  %v229 = vunpack.c.l.b16 %v212
  %v230 = vunpack.c.l.b16 %v213
  %v231 = vunpack.c.l.b16 %v214
  %v232 = vunpack.c.l.b16 %v215
  %v233 = vunpack.c.l.b16 %v216
  %v234 = vunpack.c.l.b16 %v217
  %v235 = vunpack.c.l.b16 %v218
  %vm236 = vcmask 1041409
  %v237 = vsel %vm236, %v229, %v228
  %vm238 = vcmask 1042434
  %v239 = vsel %vm238, %v230, %v237
  %vm240 = vcmask 1043459
  %v241 = vsel %vm240, %v231, %v239
  %vm242 = vcmask 1044484
  %v243 = vsel %vm242, %v232, %v241
  %vm244 = vcmask 1045509
  %v245 = vsel %vm244, %v233, %v243
  %vm246 = vcmask 1046534
  %v247 = vsel %vm246, %v234, %v245
  %vm248 = vcmask 1047559
  %v249 = vsel %vm248, %v235, %v247
  %v250 = vpack.c.b16 %v249, %v249
  %v253 = vunpack.c.l.s4 1983009808
  %v254 = vunpack.c.0.s8 %v253
  %v255 = vlaneseq
  %v256 = vshrl.u32 %v255, 7
  %v257 = vsub.s32 %v254, %v256
  %v258 = vrot.slane %v219, %v257
  %v259 = vcombine.high %v258, %v258
  %v261 = vsel %vm136, %v250, 0
  %vm263 = vcmask 1041408
  %v265 = vsel %vm263, %v258, 0
  %v268 = vsel %vm263, %v259, 0
  %270 = vmatprep.subr.bf16.mxu0 0
  %271 = vmatpush1.bf16.msra.mxu0 0
  %272 = vmatprep.subr.bf16.mxu0 0
  %273 = vmatpush1.bf16.msra.mxu0 0
  %274 = vmatprep.subr.bf16.mxu0 0
  %275 = vmatpush1.bf16.msra.mxu0 0
  %276 = vmatprep.subr.bf16.mxu0 0
  %277 = vmatpush1.bf16.msra.mxu0 0
  %278 = vmatprep.subr.bf16.mxu0 0
  %279 = vmatpush1.bf16.msra.mxu0 0
  %280 = vmatprep.subr.bf16.mxu0 0
  %281 = vmatpush1.bf16.msra.mxu0 0
  %282 = vmatprep.subr.bf16.mxu0 0
  %283 = vmatpush1.bf16.msra.mxu0 0
  %284 = vmatprep.subr.bf16.mxu0 %v268
  %285 = vmatpush1.bf16.msra.mxu0 %v265
  %286 = vmatprep.subr.bf16.mxu0 0
  %287 = vmatpush2.bf16.msra.mxu0 0
  %288 = vmatprep.subr.bf16.mxu0 0
  %289 = vmatpush2.bf16.msra.mxu0 0
  %290 = vmatprep.subr.bf16.mxu0 0
  %291 = vmatpush2.bf16.msra.mxu0 0
  %292 = vmatprep.subr.bf16.mxu0 0
  %293 = vmatpush2.bf16.msra.mxu0 0
  %294 = vmatprep.subr.bf16.mxu0 0
  %295 = vmatpush2.bf16.msra.mxu0 0
  %296 = vmatprep.subr.bf16.mxu0 0
  %297 = vmatpush2.bf16.msra.mxu0 0
  %298 = vmatprep.subr.bf16.mxu0 0
  %299 = vmatpush2.bf16.msra.mxu0 0
  %300 = vmatprep.subr.bf16.mxu0 0
  %301 = vmatpush2.bf16.msra.mxu0 0
  %302 = vmatprep.mubr.bf16.mxu0 0
  %303 = vmatmul.mubr.bf16.gmra.mxu0 %v261
  %v304 = vpop.f32.mrf.mxu0
  %v305 = vadd.f32 0.0, %v304
  %v306 = vpop.f32.mrf.mxu0
  %v307 = vadd.f32 0.0, %v306
  %v308 = vpop.f32.mrf.mxu0
  %v309 = vpop.f32.mrf.mxu0
  %310 = vdwg.mxu0
  %v319 = vunpack.c.l.b16 %v201
  %v320 = vunpack.c.l.b16 %v202
  %v321 = vunpack.c.l.b16 %v203
  %v322 = vunpack.c.l.b16 %v204
  %v323 = vunpack.c.l.b16 %v205
  %v324 = vunpack.c.l.b16 %v206
  %v325 = vunpack.c.l.b16 %v207
  %v326 = vunpack.c.l.b16 %v208
  %v327 = vsel %vm236, %v320, %v319
  %v328 = vsel %vm238, %v321, %v327
  %v329 = vsel %vm240, %v322, %v328
  %v330 = vsel %vm242, %v323, %v329
  %v331 = vsel %vm244, %v324, %v330
  %v332 = vsel %vm246, %v325, %v331
  %v333 = vsel %vm248, %v326, %v332
  %v334 = vpack.c.b16 %v333, %v333
  %v337 = vunpack.c.l.b16 %v209
  %v338 = vunpack.c.h.b16 %v209
  %v339 = vunpack.c.l.b16 %v210
  %v340 = vunpack.c.h.b16 %v210
  %v341 = vpack.c.b16 %v339, %v337
  %v342 = vpack.c.b16 %v340, %v338
  %v346 = vsel %vm55, %v334, 0
  %348 = vmatprep.subr.bf16.mxu0 0
  %349 = vmatpush1.bf16.msra.mxu0 0
  %350 = vmatprep.subr.bf16.mxu0 0
  %351 = vmatpush1.bf16.msra.mxu0 0
  %352 = vmatprep.subr.bf16.mxu0 0
  %353 = vmatpush1.bf16.msra.mxu0 0
  %354 = vmatprep.subr.bf16.mxu0 0
  %355 = vmatpush1.bf16.msra.mxu0 0
  %356 = vmatprep.subr.bf16.mxu0 0
  %357 = vmatpush1.bf16.msra.mxu0 0
  %358 = vmatprep.subr.bf16.mxu0 0
  %359 = vmatpush1.bf16.msra.mxu0 0
  %360 = vmatprep.subr.bf16.mxu0 0
  %361 = vmatpush1.bf16.msra.mxu0 0
  %362 = vmatprep.subr.bf16.mxu0 %v342
  %363 = vmatpush1.bf16.msra.mxu0 %v341
  %364 = vmatprep.subr.bf16.mxu0 0
  %365 = vmatpush2.bf16.msra.mxu0 0
  %366 = vmatprep.subr.bf16.mxu0 0
  %367 = vmatpush2.bf16.msra.mxu0 0
  %368 = vmatprep.subr.bf16.mxu0 0
  %369 = vmatpush2.bf16.msra.mxu0 0
  %370 = vmatprep.subr.bf16.mxu0 0
  %371 = vmatpush2.bf16.msra.mxu0 0
  %372 = vmatprep.subr.bf16.mxu0 0
  %373 = vmatpush2.bf16.msra.mxu0 0
  %374 = vmatprep.subr.bf16.mxu0 0
  %375 = vmatpush2.bf16.msra.mxu0 0
  %376 = vmatprep.subr.bf16.mxu0 0
  %377 = vmatpush2.bf16.msra.mxu0 0
  %378 = vmatprep.subr.bf16.mxu0 0
  %379 = vmatpush2.bf16.msra.mxu0 0
  %380 = vmatprep.mubr.bf16.mxu0 0
  %381 = vmatmul.mubr.bf16.gmra.mxu0 %v346
  %v382 = vpop.f32.mrf.mxu0
  %v383 = vadd.f32 %v305, %v382
  %v384 = vpop.f32.mrf.mxu0
  %v385 = vadd.f32 %v307, %v384
  %v386 = vpop.f32.mrf.mxu0
  %v387 = vpop.f32.mrf.mxu0
  %388 = vdwg.mxu0
  %v389 = vld [vmem:[%s4] sm:$0x3]
  %v391 = vlaneseq
  %v392 = vshrl.u32 %v391, 7
  %v393 = vsub.s32 0, %v392
  %v394 = vrot.slane %v389, %v393
  %v395 = vlaneseq
  %v396 = vshrl.u32 %v395, 7
  %v397 = vsub.s32 1, %v396
  %v398 = vrot.slane %v389, %v397
  %v401 = vadd.f32 %v383, %v394
  %v402 = vadd.f32 %v385, %v398
  %v403 = vtanh.pop %v401
  %v404 = vtanh.pop %v402
  %v405 = vpack.c.bf16 %v403, %v403
  %v406 = vpack.c.bf16 %v404, %v404
  %v407 = vld [vmem:[%s5] sm:$0xff]
  %v408 = vld [vmem:[%s5 + $0x8] sm:$0xff]
  %v409 = vld [vmem:[%s5 + $0x10] sm:$0xff]
  %v410 = vld [vmem:[%s5 + $0x18] sm:$0xff]
  %v411 = vld [vmem:[%s5 + $0x20] sm:$0xff]
  %v412 = vld [vmem:[%s5 + $0x28] sm:$0xff]
  %v413 = vld [vmem:[%s5 + $0x30] sm:$0xff]
  %v414 = vld [vmem:[%s5 + $0x38] sm:$0xff]
  %v415 = vld [vmem:[%s5 + $0x40] sm:$0xff]
  %v416 = vld [vmem:[%s5 + $0x48] sm:$0xff]
  %v417 = vld [vmem:[%s5 + $0x50] sm:$0xff]
  %v418 = vld [vmem:[%s5 + $0x58] sm:$0xff]
  %v419 = vld [vmem:[%s5 + $0x60] sm:$0xff]
  %v420 = vld [vmem:[%s5 + $0x68] sm:$0xff]
  %v421 = vld [vmem:[%s5 + $0x70] sm:$0xff]
  %v422 = vld [vmem:[%s5 + $0x78] sm:$0xff]
  %v423 = vld [vmem:[%s5 + $0x80] sm:$0xff]
  %v424 = vld [vmem:[%s5 + $0x88] sm:$0xff]
  %v425 = vld [vmem:[%s5 + $0x90] sm:$0xff]
  %v426 = vld [vmem:[%s5 + $0x98] sm:$0xff]
  %v427 = vld [vmem:[%s5 + $0xa0] sm:$0xff]
  %v428 = vld [vmem:[%s5 + $0xa8] sm:$0xff]
  %v429 = vld [vmem:[%s5 + $0xb0] sm:$0xff]
  %v430 = vld [vmem:[%s5 + $0xb8] sm:$0xff]
  %v431 = vld [vmem:[%s5 + $0xc0] sm:$0xff]
  %v432 = vld [vmem:[%s5 + $0xc8] sm:$0xff]
  %v433 = vld [vmem:[%s5 + $0xd0] sm:$0xff]
  %v434 = vld [vmem:[%s5 + $0xd8] sm:$0xff]
  %v435 = vld [vmem:[%s5 + $0xe0] sm:$0xff]
  %v436 = vld [vmem:[%s5 + $0xe8] sm:$0xff]
  %v437 = vld [vmem:[%s5 + $0xf0] sm:$0xff]
  %v438 = vld [vmem:[%s5 + $0xf8] sm:$0xff]
  %v439 = vld [vmem:[%s6] sm:$0x3]
  %v441 = vlaneseq
  %v442 = vshrl.u32 %v441, 7
  %v443 = vsub.s32 0, %v442
  %v444 = vrot.slane %v439, %v443
  %v445 = vlaneseq
  %v446 = vshrl.u32 %v445, 7
  %v447 = vsub.s32 1, %v446
  %v448 = vrot.slane %v439, %v447
  %v483 = vunpack.c.l.b16 %v407
  %v484 = vunpack.c.h.b16 %v407
  %v485 = vunpack.c.l.b16 %v408
  %v486 = vunpack.c.h.b16 %v408
  %v487 = vunpack.c.l.b16 %v409
  %v488 = vunpack.c.h.b16 %v409
  %v489 = vunpack.c.l.b16 %v410
  %v490 = vunpack.c.h.b16 %v410
  %v491 = vunpack.c.l.b16 %v411
  %v492 = vunpack.c.h.b16 %v411
  %v493 = vunpack.c.l.b16 %v412
  %v494 = vunpack.c.h.b16 %v412
  %v495 = vunpack.c.l.b16 %v413
  %v496 = vunpack.c.h.b16 %v413
  %v497 = vunpack.c.l.b16 %v414
  %v498 = vunpack.c.h.b16 %v414
  %v499 = vunpack.c.l.b16 %v415
  %v500 = vunpack.c.h.b16 %v415
  %v501 = vunpack.c.l.b16 %v416
  %v502 = vunpack.c.h.b16 %v416
  %v503 = vunpack.c.l.b16 %v417
  %v504 = vunpack.c.h.b16 %v417
  %v505 = vunpack.c.l.b16 %v418
  %v506 = vunpack.c.h.b16 %v418
  %v507 = vunpack.c.l.b16 %v419
  %v508 = vunpack.c.h.b16 %v419
  %v509 = vunpack.c.l.b16 %v420
  %v510 = vunpack.c.h.b16 %v420
  %v511 = vunpack.c.l.b16 %v421
  %v512 = vunpack.c.h.b16 %v421
  %v513 = vunpack.c.l.b16 %v422
  %v514 = vunpack.c.h.b16 %v422
  %v515 = vunpack.c.l.b16 %v423
  %v516 = vunpack.c.h.b16 %v423
  %v517 = vunpack.c.l.b16 %v424
  %v518 = vunpack.c.h.b16 %v424
  %v519 = vunpack.c.l.b16 %v425
  %v520 = vunpack.c.h.b16 %v425
  %v521 = vunpack.c.l.b16 %v426
  %v522 = vunpack.c.h.b16 %v426
  %v523 = vunpack.c.l.b16 %v427
  %v524 = vunpack.c.h.b16 %v427
  %v525 = vunpack.c.l.b16 %v428
  %v526 = vunpack.c.h.b16 %v428
  %v527 = vunpack.c.l.b16 %v429
  %v528 = vunpack.c.h.b16 %v429
  %v529 = vunpack.c.l.b16 %v430
  %v530 = vunpack.c.h.b16 %v430
  %v531 = vunpack.c.l.b16 %v431
  %v532 = vunpack.c.h.b16 %v431
  %v533 = vunpack.c.l.b16 %v432
  %v534 = vunpack.c.h.b16 %v432
  %v535 = vunpack.c.l.b16 %v433
  %v536 = vunpack.c.h.b16 %v433
  %v537 = vunpack.c.l.b16 %v434
  %v538 = vunpack.c.h.b16 %v434
  %v539 = vunpack.c.l.b16 %v435
  %v540 = vunpack.c.h.b16 %v435
  %v541 = vunpack.c.l.b16 %v436
  %v542 = vunpack.c.h.b16 %v436
  %v543 = vunpack.c.l.b16 %v437
  %v544 = vunpack.c.h.b16 %v437
  %v545 = vunpack.c.l.b16 %v438
  %v546 = vunpack.c.h.b16 %v438
  %v547 = vpack.c.b16 %v485, %v483
  %v548 = vpack.c.b16 %v486, %v484
  %v549 = vpack.c.b16 %v489, %v487
  %v550 = vpack.c.b16 %v490, %v488
  %v551 = vpack.c.b16 %v493, %v491
  %v552 = vpack.c.b16 %v494, %v492
  %v553 = vpack.c.b16 %v497, %v495
  %v554 = vpack.c.b16 %v498, %v496
  %v555 = vpack.c.b16 %v501, %v499
  %v556 = vpack.c.b16 %v502, %v500
  %v557 = vpack.c.b16 %v505, %v503
  %v558 = vpack.c.b16 %v506, %v504
  %v559 = vpack.c.b16 %v509, %v507
  %v560 = vpack.c.b16 %v510, %v508
  %v561 = vpack.c.b16 %v513, %v511
  %v562 = vpack.c.b16 %v514, %v512
  %v563 = vpack.c.b16 %v517, %v515
  %v564 = vpack.c.b16 %v518, %v516
  %v565 = vpack.c.b16 %v521, %v519
  %v566 = vpack.c.b16 %v522, %v520
  %v567 = vpack.c.b16 %v525, %v523
  %v568 = vpack.c.b16 %v526, %v524
  %v569 = vpack.c.b16 %v529, %v527
  %v570 = vpack.c.b16 %v530, %v528
  %v571 = vpack.c.b16 %v533, %v531
  %v572 = vpack.c.b16 %v534, %v532
  %v573 = vpack.c.b16 %v537, %v535
  %v574 = vpack.c.b16 %v538, %v536
  %v575 = vpack.c.b16 %v541, %v539
  %v576 = vpack.c.b16 %v542, %v540
  %v577 = vpack.c.b16 %v545, %v543
  %v578 = vpack.c.b16 %v546, %v544
  %611 = vmatprep.subr.bf16.mxu0 %v562
  %612 = vmatpush1.bf16.msra.mxu0 %v561
  %613 = vmatprep.subr.bf16.mxu0 %v560
  %614 = vmatpush1.bf16.msra.mxu0 %v559
  %615 = vmatprep.subr.bf16.mxu0 %v558
  %616 = vmatpush1.bf16.msra.mxu0 %v557
  %617 = vmatprep.subr.bf16.mxu0 %v556
  %618 = vmatpush1.bf16.msra.mxu0 %v555
  %619 = vmatprep.subr.bf16.mxu0 %v554
  %620 = vmatpush1.bf16.msra.mxu0 %v553
  %621 = vmatprep.subr.bf16.mxu0 %v552
  %622 = vmatpush1.bf16.msra.mxu0 %v551
  %623 = vmatprep.subr.bf16.mxu0 %v550
  %624 = vmatpush1.bf16.msra.mxu0 %v549
  %625 = vmatprep.subr.bf16.mxu0 %v548
  %626 = vmatpush1.bf16.msra.mxu0 %v547
  %627 = vmatprep.subr.bf16.mxu0 %v578
  %628 = vmatpush2.bf16.msra.mxu0 %v577
  %629 = vmatprep.subr.bf16.mxu0 %v576
  %630 = vmatpush2.bf16.msra.mxu0 %v575
  %631 = vmatprep.subr.bf16.mxu0 %v574
  %632 = vmatpush2.bf16.msra.mxu0 %v573
  %633 = vmatprep.subr.bf16.mxu0 %v572
  %634 = vmatpush2.bf16.msra.mxu0 %v571
  %635 = vmatprep.subr.bf16.mxu0 %v570
  %636 = vmatpush2.bf16.msra.mxu0 %v569
  %637 = vmatprep.subr.bf16.mxu0 %v568
  %638 = vmatpush2.bf16.msra.mxu0 %v567
  %639 = vmatprep.subr.bf16.mxu0 %v566
  %640 = vmatpush2.bf16.msra.mxu0 %v565
  %641 = vmatprep.subr.bf16.mxu0 %v564
  %642 = vmatpush2.bf16.msra.mxu0 %v563
  %643 = vmatprep.mubr.bf16.mxu0 %v406
  %644 = vmatmul.mubr.bf16.gmra.mxu0 %v405
  %v645 = vpop.f32.mrf.mxu0
  %v646 = vadd.f32 %v444, %v645
  %v647 = vpop.f32.mrf.mxu0
  %v648 = vadd.f32 %v448, %v647
  %v649 = vpop.f32.mrf.mxu0
  %v650 = vpop.f32.mrf.mxu0
  %651 = vdwg.mxu0
  %v652 = vmul.f32 %v646, 0.5
  %v653 = vmul.f32 %v648, 0.5
  %v654 = vmul.f32 %v646, 0.70710677
  %v655 = vmul.f32 %v648, 0.70710677
  %v656 = verf.f32.pop %v654
  %v657 = verf.f32.pop %v655
  %v658 = vadd.f32 %v656, 1.0
  %v659 = vadd.f32 %v657, 1.0
  %v660 = vmul.f32 %v652, %v658
  %v661 = vmul.f32 %v653, %v659
  %v662 = vadd.f32 %v660, %v661
  %663 = vadd.xlane.f32.xlu0 %v662
  %v664 = vpop.xlane.xlu0 %663
  %v665 = vmul.f32 %v664, 0.015625
  %v666 = vmul.f32 %v660, %v660
  %v667 = vmul.f32 %v661, %v661
  %v668 = vadd.f32 %v666, %v667
  %669 = vadd.xlane.f32.xlu0 %v668
  %v670 = vpop.xlane.xlu0 %669
  %v671 = vmul.f32 %v670, 0.015625
  %v672 = vmul.f32 %v665, %v665
  %v673 = vsub.f32 %v671, %v672
  %v674 = vmax.f32 %v673, 0.0
  %v675 = vsub.f32 %v660, %v665
  %v676 = vsub.f32 %v661, %v665
  %v677 = vadd.f32 %v674, 1e-12
  %v678 = vrsqrt.pop %v677
  %v679 = vmul.f32 %v675, %v678
  %v680 = vmul.f32 %v676, %v678
  %v681 = vld [vmem:[%s7] sm:$0x3]
  %v683 = vlaneseq
  %v684 = vshrl.u32 %v683, 7
  %v685 = vsub.s32 0, %v684
  %v686 = vrot.slane %v681, %v685
  %v687 = vlaneseq
  %v688 = vshrl.u32 %v687, 7
  %v689 = vsub.s32 1, %v688
  %v690 = vrot.slane %v681, %v689
  %v693 = vmul.f32 %v679, %v686
  %v694 = vmul.f32 %v680, %v690
  %v695 = vld [vmem:[%s8] sm:$0x3]
  %v697 = vlaneseq
  %v698 = vshrl.u32 %v697, 7
  %v699 = vsub.s32 0, %v698
  %v700 = vrot.slane %v695, %v699
  %v701 = vlaneseq
  %v702 = vshrl.u32 %v701, 7
  %v703 = vsub.s32 1, %v702
  %v704 = vrot.slane %v695, %v703
  %v707 = vadd.f32 %v693, %v700
  %v708 = vadd.f32 %v694, %v704
  %v709 = vpack.c.bf16 %v707, %v707
  %v710 = vpack.c.bf16 %v708, %v708
  %v711 = vld [vmem:[%s9] sm:$0xff]
  %v712 = vld [vmem:[%s9 + $0x8] sm:$0xff]
  %v713 = vld [vmem:[%s9 + $0x10] sm:$0xff]
  %v714 = vld [vmem:[%s9 + $0x18] sm:$0xff]
  %v715 = vld [vmem:[%s9 + $0x20] sm:$0xff]
  %v716 = vld [vmem:[%s9 + $0x28] sm:$0xff]
  %v717 = vld [vmem:[%s9 + $0x30] sm:$0xff]
  %v718 = vld [vmem:[%s9 + $0x38] sm:$0xff]
  %v719 = vld [vmem:[%s9 + $0x40] sm:$0xff]
  %v720 = vld [vmem:[%s9 + $0x48] sm:$0xff]
  %v721 = vld [vmem:[%s9 + $0x50] sm:$0xff]
  %v722 = vld [vmem:[%s9 + $0x58] sm:$0xff]
  %v723 = vld [vmem:[%s9 + $0x60] sm:$0xff]
  %v724 = vld [vmem:[%s9 + $0x68] sm:$0xff]
  %v725 = vld [vmem:[%s9 + $0x70] sm:$0xff]
  %v726 = vld [vmem:[%s9 + $0x78] sm:$0xff]
  %v727 = vld [vmem:[%s9 + $0x80] sm:$0xff]
  %v728 = vld [vmem:[%s9 + $0x88] sm:$0xff]
  %v729 = vld [vmem:[%s9 + $0x90] sm:$0xff]
  %v730 = vld [vmem:[%s9 + $0x98] sm:$0xff]
  %v731 = vld [vmem:[%s9 + $0xa0] sm:$0xff]
  %v732 = vld [vmem:[%s9 + $0xa8] sm:$0xff]
  %v733 = vld [vmem:[%s9 + $0xb0] sm:$0xff]
  %v734 = vld [vmem:[%s9 + $0xb8] sm:$0xff]
  %v735 = vld [vmem:[%s9 + $0xc0] sm:$0xff]
  %v736 = vld [vmem:[%s9 + $0xc8] sm:$0xff]
  %v737 = vld [vmem:[%s9 + $0xd0] sm:$0xff]
  %v738 = vld [vmem:[%s9 + $0xd8] sm:$0xff]
  %v739 = vld [vmem:[%s9 + $0xe0] sm:$0xff]
  %v740 = vld [vmem:[%s9 + $0xe8] sm:$0xff]
  %v741 = vld [vmem:[%s9 + $0xf0] sm:$0xff]
  %v742 = vld [vmem:[%s9 + $0xf8] sm:$0xff]
  %v743 = vld [vmem:[%s10] sm:$0x3]
  %v745 = vlaneseq
  %v746 = vshrl.u32 %v745, 7
  %v747 = vsub.s32 0, %v746
  %v748 = vrot.slane %v743, %v747
  %v749 = vlaneseq
  %v750 = vshrl.u32 %v749, 7
  %v751 = vsub.s32 1, %v750
  %v752 = vrot.slane %v743, %v751
  %v787 = vunpack.c.l.b16 %v711
  %v788 = vunpack.c.h.b16 %v711
  %v789 = vunpack.c.l.b16 %v712
  %v790 = vunpack.c.h.b16 %v712
  %v791 = vunpack.c.l.b16 %v713
  %v792 = vunpack.c.h.b16 %v713
  %v793 = vunpack.c.l.b16 %v714
  %v794 = vunpack.c.h.b16 %v714
  %v795 = vunpack.c.l.b16 %v715
  %v796 = vunpack.c.h.b16 %v715
  %v797 = vunpack.c.l.b16 %v716
  %v798 = vunpack.c.h.b16 %v716
  %v799 = vunpack.c.l.b16 %v717
  %v800 = vunpack.c.h.b16 %v717
  %v801 = vunpack.c.l.b16 %v718
  %v802 = vunpack.c.h.b16 %v718
  %v803 = vunpack.c.l.b16 %v719
  %v804 = vunpack.c.h.b16 %v719
  %v805 = vunpack.c.l.b16 %v720
  %v806 = vunpack.c.h.b16 %v720
  %v807 = vunpack.c.l.b16 %v721
  %v808 = vunpack.c.h.b16 %v721
  %v809 = vunpack.c.l.b16 %v722
  %v810 = vunpack.c.h.b16 %v722
  %v811 = vunpack.c.l.b16 %v723
  %v812 = vunpack.c.h.b16 %v723
  %v813 = vunpack.c.l.b16 %v724
  %v814 = vunpack.c.h.b16 %v724
  %v815 = vunpack.c.l.b16 %v725
  %v816 = vunpack.c.h.b16 %v725
  %v817 = vunpack.c.l.b16 %v726
  %v818 = vunpack.c.h.b16 %v726
  %v819 = vunpack.c.l.b16 %v727
  %v820 = vunpack.c.h.b16 %v727
  %v821 = vunpack.c.l.b16 %v728
  %v822 = vunpack.c.h.b16 %v728
  %v823 = vunpack.c.l.b16 %v729
  %v824 = vunpack.c.h.b16 %v729
  %v825 = vunpack.c.l.b16 %v730
  %v826 = vunpack.c.h.b16 %v730
  %v827 = vunpack.c.l.b16 %v731
  %v828 = vunpack.c.h.b16 %v731
  %v829 = vunpack.c.l.b16 %v732
  %v830 = vunpack.c.h.b16 %v732
  %v831 = vunpack.c.l.b16 %v733
  %v832 = vunpack.c.h.b16 %v733
  %v833 = vunpack.c.l.b16 %v734
  %v834 = vunpack.c.h.b16 %v734
  %v835 = vunpack.c.l.b16 %v735
  %v836 = vunpack.c.h.b16 %v735
  %v837 = vunpack.c.l.b16 %v736
  %v838 = vunpack.c.h.b16 %v736
  %v839 = vunpack.c.l.b16 %v737
  %v840 = vunpack.c.h.b16 %v737
  %v841 = vunpack.c.l.b16 %v738
  %v842 = vunpack.c.h.b16 %v738
  %v843 = vunpack.c.l.b16 %v739
  %v844 = vunpack.c.h.b16 %v739
  %v845 = vunpack.c.l.b16 %v740
  %v846 = vunpack.c.h.b16 %v740
  %v847 = vunpack.c.l.b16 %v741
  %v848 = vunpack.c.h.b16 %v741
  %v849 = vunpack.c.l.b16 %v742
  %v850 = vunpack.c.h.b16 %v742
  %v851 = vpack.c.b16 %v789, %v787
  %v852 = vpack.c.b16 %v790, %v788
  %v853 = vpack.c.b16 %v793, %v791
  %v854 = vpack.c.b16 %v794, %v792
  %v855 = vpack.c.b16 %v797, %v795
  %v856 = vpack.c.b16 %v798, %v796
  %v857 = vpack.c.b16 %v801, %v799
  %v858 = vpack.c.b16 %v802, %v800
  %v859 = vpack.c.b16 %v805, %v803
  %v860 = vpack.c.b16 %v806, %v804
  %v861 = vpack.c.b16 %v809, %v807
  %v862 = vpack.c.b16 %v810, %v808
  %v863 = vpack.c.b16 %v813, %v811
  %v864 = vpack.c.b16 %v814, %v812
  %v865 = vpack.c.b16 %v817, %v815
  %v866 = vpack.c.b16 %v818, %v816
  %v867 = vpack.c.b16 %v821, %v819
  %v868 = vpack.c.b16 %v822, %v820
  %v869 = vpack.c.b16 %v825, %v823
  %v870 = vpack.c.b16 %v826, %v824
  %v871 = vpack.c.b16 %v829, %v827
  %v872 = vpack.c.b16 %v830, %v828
  %v873 = vpack.c.b16 %v833, %v831
  %v874 = vpack.c.b16 %v834, %v832
  %v875 = vpack.c.b16 %v837, %v835
  %v876 = vpack.c.b16 %v838, %v836
  %v877 = vpack.c.b16 %v841, %v839
  %v878 = vpack.c.b16 %v842, %v840
  %v879 = vpack.c.b16 %v845, %v843
  %v880 = vpack.c.b16 %v846, %v844
  %v881 = vpack.c.b16 %v849, %v847
  %v882 = vpack.c.b16 %v850, %v848
  %915 = vmatprep.subr.bf16.mxu0 %v866
  %916 = vmatpush1.bf16.msra.mxu0 %v865
  %917 = vmatprep.subr.bf16.mxu0 %v864
  %918 = vmatpush1.bf16.msra.mxu0 %v863
  %919 = vmatprep.subr.bf16.mxu0 %v862
  %920 = vmatpush1.bf16.msra.mxu0 %v861
  %921 = vmatprep.subr.bf16.mxu0 %v860
  %922 = vmatpush1.bf16.msra.mxu0 %v859
  %923 = vmatprep.subr.bf16.mxu0 %v858
  %924 = vmatpush1.bf16.msra.mxu0 %v857
  %925 = vmatprep.subr.bf16.mxu0 %v856
  %926 = vmatpush1.bf16.msra.mxu0 %v855
  %927 = vmatprep.subr.bf16.mxu0 %v854
  %928 = vmatpush1.bf16.msra.mxu0 %v853
  %929 = vmatprep.subr.bf16.mxu0 %v852
  %930 = vmatpush1.bf16.msra.mxu0 %v851
  %931 = vmatprep.subr.bf16.mxu0 %v882
  %932 = vmatpush2.bf16.msra.mxu0 %v881
  %933 = vmatprep.subr.bf16.mxu0 %v880
  %934 = vmatpush2.bf16.msra.mxu0 %v879
  %935 = vmatprep.subr.bf16.mxu0 %v878
  %936 = vmatpush2.bf16.msra.mxu0 %v877
  %937 = vmatprep.subr.bf16.mxu0 %v876
  %938 = vmatpush2.bf16.msra.mxu0 %v875
  %939 = vmatprep.subr.bf16.mxu0 %v874
  %940 = vmatpush2.bf16.msra.mxu0 %v873
  %941 = vmatprep.subr.bf16.mxu0 %v872
  %942 = vmatpush2.bf16.msra.mxu0 %v871
  %943 = vmatprep.subr.bf16.mxu0 %v870
  %944 = vmatpush2.bf16.msra.mxu0 %v869
  %945 = vmatprep.subr.bf16.mxu0 %v868
  %946 = vmatpush2.bf16.msra.mxu0 %v867
  %947 = vmatprep.mubr.bf16.mxu0 %v710
  %948 = vmatmul.mubr.bf16.gmra.mxu0 %v709
  %v949 = vpop.f32.mrf.mxu0
  %v950 = vadd.f32 %v748, %v949
  %v951 = vpop.f32.mrf.mxu0
  %v952 = vadd.f32 %v752, %v951
  %v953 = vpop.f32.mrf.mxu0
  %v954 = vpop.f32.mrf.mxu0
  %955 = vdwg.mxu0
  %956 = vst [vmem:[%s11] sm:$0xff] %v950
  %957 = vst [vmem:[%s11 + $0x8] sm:$0xff] %v952
  // Predicated region
  $region46: #{_gqa_forward_impl.1} parent=0 // pred_check
    _
  $region47: #{_gqa_forward_impl.1} parent=0 // pred_check_branch
    %959 = sbr.rel (0) target = $region49
  $region48: #{_gqa_forward_impl.1} parent=0 // pred_region
    _
  $region49: #{_gqa_forward_impl.1} parent=0 // pred_fallthru
    _
  // Predicated region
  $region50: #{_gqa_forward_impl.1} parent=0 // pred_check
    _
  $region51: #{_gqa_forward_impl.1} parent=0 // pred_check_branch
    %961 = sbr.rel (0) target = $region53
  $region52: #{_gqa_forward_impl.1} parent=0 // pred_region
    _
  $region53: #{_gqa_forward_impl.1} parent=0 // pred_fallthru
    _

// kernel: _gqa_forward_impl.1
$region0: #{_gqa_forward_impl.1}
  #allocation0 [shape = 'u32[]', space=smem, size = 0x4, offset = 0x4, fixed_abs, tag = 'smem constant byte address 0x4 - core index']
  #allocation1 [shape = 'u32[144,128]{1,0:T(1,128)}', space=vmem, size = 0x12000, scoped, tag = 'internal scratch']
  %s0 = inlined_call_operand.vmem [shape: bf16[8,8,16], index: 0, kind: input, shape index: {}]
  %s1 = inlined_call_operand.vmem [shape: bf16[8,8,4], index: 1, kind: input, shape index: {}]
  %s2 = inlined_call_operand.vmem [shape: bf16[16,256], index: 2, kind: input, shape index: {}]
  %s3 = inlined_call_operand.vmem [shape: bf16[4,256], index: 3, kind: input, shape index: {}]
  %s4 = inlined_call_operand.vmem [shape: f32[1,256], index: 4, kind: input, shape index: {}]
  %s5 = inlined_call_operand.vmem [shape: bf16[256,256], index: 5, kind: input, shape index: {}]
  %s6 = inlined_call_operand.vmem [shape: f32[1,256], index: 6, kind: input, shape index: {}]
  %s7 = inlined_call_operand.vmem [shape: f32[1,256], index: 7, kind: input, shape index: {}]
  %s8 = inlined_call_operand.vmem [shape: f32[1,256], index: 8, kind: input, shape index: {}]
  %s9 = inlined_call_operand.vmem [shape: bf16[256,256], index: 9, kind: input, shape index: {}]
  %s10 = inlined_call_operand.vmem [shape: f32[1,256], index: 10, kind: input, shape index: {}]
  %s11 = inlined_call_operand.vmem [shape: f32[8,256], index: 11, kind: output, shape index: {}]
  %s12 = sld [smem:[#allocation0]]
  $region54: #{_gqa_forward_impl.1} parent=0
    _
  %s14 = ssub.s32 1, %s12
  %s15 = scalar_select 0, %s14, %s12
  // Predicated region
  $region2: #{_gqa_forward_impl.1} parent=0 // pred_check
    _
  $region3: #{_gqa_forward_impl.1} parent=0 // pred_check_branch
    %17 = sbr.rel (0) target = $region5
  $region4: #{_gqa_forward_impl.1} parent=0 // pred_region
    _
  $region5: #{_gqa_forward_impl.1} parent=0 // pred_fallthru
    _
  // Predicated region
  $region6: #{_gqa_forward_impl.1} parent=0 // pred_check
    _
  $region7: #{_gqa_forward_impl.1} parent=0 // pred_check_branch
    %19 = sbr.rel (0) target = $region9
  $region8: #{_gqa_forward_impl.1} parent=0 // pred_region
    _
  $region9: #{_gqa_forward_impl.1} parent=0 // pred_fallthru
    _
  // Predicated region
  $region10: #{_gqa_forward_impl.1} parent=0 // pred_check
    _
  $region11: #{_gqa_forward_impl.1} parent=0 // pred_check_branch
    %21 = sbr.rel (0) target = $region13
  $region12: #{_gqa_forward_impl.1} parent=0 // pred_region
    _
  $region13: #{_gqa_forward_impl.1} parent=0 // pred_fallthru
    _
  // Predicated region
  $region14: #{_gqa_forward_impl.1} parent=0 // pred_check
    _
  $region15: #{_gqa_forward_impl.1} parent=0 // pred_check_branch
    %23 = sbr.rel (0) target = $region17
  $region16: #{_gqa_forward_impl.1} parent=0 // pred_region
    _
  $region17: #{_gqa_forward_impl.1} parent=0 // pred_fallthru
    _
  // Predicated region
  $region18: #{_gqa_forward_impl.1} parent=0 // pred_check
    _
  $region19: #{_gqa_forward_impl.1} parent=0 // pred_check_branch
    %25 = sbr.rel (0) target = $region21
  $region20: #{_gqa_forward_impl.1} parent=0 // pred_region
    _
  $region21: #{_gqa_forward_impl.1} parent=0 // pred_fallthru
    _
  // Predicated region
  $region22: #{_gqa_forward_impl.1} parent=0 // pred_check
    _
  $region23: #{_gqa_forward_impl.1} parent=0 // pred_check_branch
    %27 = sbr.rel (0) target = $region25
  $region24: #{_gqa_forward_impl.1} parent=0 // pred_region
    _
  $region25: #{_gqa_forward_impl.1} parent=0 // pred_fallthru
    _
  // Predicated region
  $region26: #{_gqa_forward_impl.1} parent=0 // pred_check
    _
  $region27: #{_gqa_forward_impl.1} parent=0 // pred_check_branch
    %29 = sbr.rel (0) target = $region29
  $region28: #{_gqa_forward_impl.1} parent=0 // pred_region
    _
  $region29: #{_gqa_forward_impl.1} parent=0 // pred_fallthru
    _
  // Predicated region
  $region30: #{_gqa_forward_impl.1} parent=0 // pred_check
    _
  $region31: #{_gqa_forward_impl.1} parent=0 // pred_check_branch
    %31 = sbr.rel (0) target = $region33
  $region32: #{_gqa_forward_impl.1} parent=0 // pred_region
    _
  $region33: #{_gqa_forward_impl.1} parent=0 // pred_fallthru
    _
  // Predicated region
  $region34: #{_gqa_forward_impl.1} parent=0 // pred_check
    _
  $region35: #{_gqa_forward_impl.1} parent=0 // pred_check_branch
    %33 = sbr.rel (0) target = $region37
  $region36: #{_gqa_forward_impl.1} parent=0 // pred_region
    _
  $region37: #{_gqa_forward_impl.1} parent=0 // pred_fallthru
    _
  // Predicated region
  $region38: #{_gqa_forward_impl.1} parent=0 // pred_check
    _
  $region39: #{_gqa_forward_impl.1} parent=0 // pred_check_branch
    %35 = sbr.rel (0) target = $region41
  $region40: #{_gqa_forward_impl.1} parent=0 // pred_region
    _
  $region41: #{_gqa_forward_impl.1} parent=0 // pred_fallthru
    _
  // Predicated region
  $region42: #{_gqa_forward_impl.1} parent=0 // pred_check
    _
  $region43: #{_gqa_forward_impl.1} parent=0 // pred_check_branch
    %37 = sbr.rel (0) target = $region45
  $region44: #{_gqa_forward_impl.1} parent=0 // pred_region
    _
  $region45: #{_gqa_forward_impl.1} parent=0 // pred_fallthru
    _
  %v39 = vld [vmem:[%s0] sm:$0xf]
  %v40 = vld [vmem:[%s0 + $0x4] sm:$0xf]
  %v41 = vld [vmem:[%s0 + $0x8] sm:$0xf]
  %v42 = vld [vmem:[%s0 + $0xc] sm:$0xf]
  %v43 = vld [vmem:[%s0 + $0x10] sm:$0xf]
  %v44 = vld [vmem:[%s0 + $0x14] sm:$0xf]
  %v45 = vld [vmem:[%s0 + $0x18] sm:$0xf]
  %v46 = vld [vmem:[%s0 + $0x1c] sm:$0xf]
  %v47 = vunpack.c.l.bf16 %v39
  %v48 = vunpack.c.l.bf16 %v40
  %v49 = vunpack.c.l.bf16 %v41
  %v50 = vunpack.c.l.bf16 %v42
  %v51 = vunpack.c.l.bf16 %v43
  %v52 = vunpack.c.l.bf16 %v44
  %v53 = vunpack.c.l.bf16 %v45
  %v54 = vunpack.c.l.bf16 %v46
  %vm55 = vcmask 130048
  %v56 = vsel %vm55, %v47, 0.0
  %v57 = vrot.slane %v56, 4
  %v58 = vadd.f32 %v56, %v57
  %v59 = vrot.slane %v58, 2
  %v60 = vadd.f32 %v58, %v59
  %v61 = vrot.slane %v60, 1
  %v62 = vadd.f32 %v60, %v61
  %v63 = vsel %vm55, %v48, 0.0
  %v64 = vrot.slane %v63, 4
  %v65 = vadd.f32 %v63, %v64
  %v66 = vrot.slane %v65, 2
  %v67 = vadd.f32 %v65, %v66
  %v68 = vrot.slane %v67, 1
  %v69 = vadd.f32 %v67, %v68
  %v70 = vsel %vm55, %v49, 0.0
  %v71 = vrot.slane %v70, 4
  %v72 = vadd.f32 %v70, %v71
  %v73 = vrot.slane %v72, 2
  %v74 = vadd.f32 %v72, %v73
  %v75 = vrot.slane %v74, 1
  %v76 = vadd.f32 %v74, %v75
  %v77 = vsel %vm55, %v50, 0.0
  %v78 = vrot.slane %v77, 4
  %v79 = vadd.f32 %v77, %v78
  %v80 = vrot.slane %v79, 2
  %v81 = vadd.f32 %v79, %v80
  %v82 = vrot.slane %v81, 1
  %v83 = vadd.f32 %v81, %v82
  %v84 = vsel %vm55, %v51, 0.0
  %v85 = vrot.slane %v84, 4
  %v86 = vadd.f32 %v84, %v85
  %v87 = vrot.slane %v86, 2
  %v88 = vadd.f32 %v86, %v87
  %v89 = vrot.slane %v88, 1
  %v90 = vadd.f32 %v88, %v89
  %v91 = vsel %vm55, %v52, 0.0
  %v92 = vrot.slane %v91, 4
  %v93 = vadd.f32 %v91, %v92
  %v94 = vrot.slane %v93, 2
  %v95 = vadd.f32 %v93, %v94
  %v96 = vrot.slane %v95, 1
  %v97 = vadd.f32 %v95, %v96
  %v98 = vsel %vm55, %v53, 0.0
  %v99 = vrot.slane %v98, 4
  %v100 = vadd.f32 %v98, %v99
  %v101 = vrot.slane %v100, 2
  %v102 = vadd.f32 %v100, %v101
  %v103 = vrot.slane %v102, 1
  %v104 = vadd.f32 %v102, %v103
  %v105 = vsel %vm55, %v54, 0.0
  %v106 = vrot.slane %v105, 4
  %v107 = vadd.f32 %v105, %v106
  %v108 = vrot.slane %v107, 2
  %v109 = vadd.f32 %v107, %v108
  %v110 = vrot.slane %v109, 1
  %v111 = vadd.f32 %v109, %v110
  %v112 = vmul.f32 %v62, 0.125
  %v113 = vmul.f32 %v69, 0.125
  %v114 = vmul.f32 %v76, 0.125
  %v115 = vmul.f32 %v83, 0.125
  %v116 = vmul.f32 %v90, 0.125
  %v117 = vmul.f32 %v97, 0.125
  %v118 = vmul.f32 %v104, 0.125
  %v119 = vmul.f32 %v111, 0.125
  %v120 = vld [vmem:[%s1] sm:$0xf]
  %v121 = vld [vmem:[%s1 + $0x4] sm:$0xf]
  %v122 = vld [vmem:[%s1 + $0x8] sm:$0xf]
  %v123 = vld [vmem:[%s1 + $0xc] sm:$0xf]
  %v124 = vld [vmem:[%s1 + $0x10] sm:$0xf]
  %v125 = vld [vmem:[%s1 + $0x14] sm:$0xf]
  %v126 = vld [vmem:[%s1 + $0x18] sm:$0xf]
  %v127 = vld [vmem:[%s1 + $0x1c] sm:$0xf]
  %v128 = vunpack.c.l.bf16 %v120
  %v129 = vunpack.c.l.bf16 %v121
  %v130 = vunpack.c.l.bf16 %v122
  %v131 = vunpack.c.l.bf16 %v123
  %v132 = vunpack.c.l.bf16 %v124
  %v133 = vunpack.c.l.bf16 %v125
  %v134 = vunpack.c.l.bf16 %v126
  %v135 = vunpack.c.l.bf16 %v127
  %vm136 = vcmask 31744
  %v137 = vsel %vm136, %v128, 0.0
  %v138 = vrot.slane %v137, 4
  %v139 = vadd.f32 %v137, %v138
  %v140 = vrot.slane %v139, 2
  %v141 = vadd.f32 %v139, %v140
  %v142 = vrot.slane %v141, 1
  %v143 = vadd.f32 %v141, %v142
  %v144 = vsel %vm136, %v129, 0.0
  %v145 = vrot.slane %v144, 4
  %v146 = vadd.f32 %v144, %v145
  %v147 = vrot.slane %v146, 2
  %v148 = vadd.f32 %v146, %v147
  %v149 = vrot.slane %v148, 1
  %v150 = vadd.f32 %v148, %v149
  %v151 = vsel %vm136, %v130, 0.0
  %v152 = vrot.slane %v151, 4
  %v153 = vadd.f32 %v151, %v152
  %v154 = vrot.slane %v153, 2
  %v155 = vadd.f32 %v153, %v154
  %v156 = vrot.slane %v155, 1
  %v157 = vadd.f32 %v155, %v156
  %v158 = vsel %vm136, %v131, 0.0
  %v159 = vrot.slane %v158, 4
  %v160 = vadd.f32 %v158, %v159
  %v161 = vrot.slane %v160, 2
  %v162 = vadd.f32 %v160, %v161
  %v163 = vrot.slane %v162, 1
  %v164 = vadd.f32 %v162, %v163
  %v165 = vsel %vm136, %v132, 0.0
  %v166 = vrot.slane %v165, 4
  %v167 = vadd.f32 %v165, %v166
  %v168 = vrot.slane %v167, 2
  %v169 = vadd.f32 %v167, %v168
  %v170 = vrot.slane %v169, 1
  %v171 = vadd.f32 %v169, %v170
  %v172 = vsel %vm136, %v133, 0.0
  %v173 = vrot.slane %v172, 4
  %v174 = vadd.f32 %v172, %v173
  %v175 = vrot.slane %v174, 2
  %v176 = vadd.f32 %v174, %v175
  %v177 = vrot.slane %v176, 1
  %v178 = vadd.f32 %v176, %v177
  %v179 = vsel %vm136, %v134, 0.0
  %v180 = vrot.slane %v179, 4
  %v181 = vadd.f32 %v179, %v180
  %v182 = vrot.slane %v181, 2
  %v183 = vadd.f32 %v181, %v182
  %v184 = vrot.slane %v183, 1
  %v185 = vadd.f32 %v183, %v184
  %v186 = vsel %vm136, %v135, 0.0
  %v187 = vrot.slane %v186, 4
  %v188 = vadd.f32 %v186, %v187
  %v189 = vrot.slane %v188, 2
  %v190 = vadd.f32 %v188, %v189
  %v191 = vrot.slane %v190, 1
  %v192 = vadd.f32 %v190, %v191
  %v193 = vmul.f32 %v143, 0.125
  %v194 = vmul.f32 %v150, 0.125
  %v195 = vmul.f32 %v157, 0.125
  %v196 = vmul.f32 %v164, 0.125
  %v197 = vmul.f32 %v171, 0.125
  %v198 = vmul.f32 %v178, 0.125
  %v199 = vmul.f32 %v185, 0.125
  %v200 = vmul.f32 %v192, 0.125
  %v201 = vpack.c.bf16 %v112, %v112
  %v202 = vpack.c.bf16 %v113, %v113
  %v203 = vpack.c.bf16 %v114, %v114
  %v204 = vpack.c.bf16 %v115, %v115
  %v205 = vpack.c.bf16 %v116, %v116
  %v206 = vpack.c.bf16 %v117, %v117
  %v207 = vpack.c.bf16 %v118, %v118
  %v208 = vpack.c.bf16 %v119, %v119
  %v209 = vld [vmem:[%s2] sm:$0xff]
  %v210 = vld [vmem:[%s2 + $0x8] sm:$0xff]
  %v211 = vpack.c.bf16 %v193, %v193
  %v212 = vpack.c.bf16 %v194, %v194
  %v213 = vpack.c.bf16 %v195, %v195
  %v214 = vpack.c.bf16 %v196, %v196
  %v215 = vpack.c.bf16 %v197, %v197
  %v216 = vpack.c.bf16 %v198, %v198
  %v217 = vpack.c.bf16 %v199, %v199
  %v218 = vpack.c.bf16 %v200, %v200
  %v219 = vld [vmem:[%s3] sm:$0xf]
  %v228 = vunpack.c.l.b16 %v211
  %v229 = vunpack.c.l.b16 %v212
  %v230 = vunpack.c.l.b16 %v213
  %v231 = vunpack.c.l.b16 %v214
  %v232 = vunpack.c.l.b16 %v215
  %v233 = vunpack.c.l.b16 %v216
  %v234 = vunpack.c.l.b16 %v217
  %v235 = vunpack.c.l.b16 %v218
  %vm236 = vcmask 1041409
  %v237 = vsel %vm236, %v229, %v228
  %vm238 = vcmask 1042434
  %v239 = vsel %vm238, %v230, %v237
  %vm240 = vcmask 1043459
  %v241 = vsel %vm240, %v231, %v239
  %vm242 = vcmask 1044484
  %v243 = vsel %vm242, %v232, %v241
  %vm244 = vcmask 1045509
  %v245 = vsel %vm244, %v233, %v243
  %vm246 = vcmask 1046534
  %v247 = vsel %vm246, %v234, %v245
  %vm248 = vcmask 1047559
  %v249 = vsel %vm248, %v235, %v247
  %v250 = vpack.c.b16 %v249, %v249
  %v253 = vunpack.c.l.s4 1983009808
  %v254 = vunpack.c.0.s8 %v253
  %v255 = vlaneseq
  %v256 = vshrl.u32 %v255, 7
  %v257 = vsub.s32 %v254, %v256
  %v258 = vrot.slane %v219, %v257
  %v259 = vcombine.high %v258, %v258
  %v261 = vsel %vm136, %v250, 0
  %vm263 = vcmask 1041408
  %v265 = vsel %vm263, %v258, 0
  %v268 = vsel %vm263, %v259, 0
  %270 = vmatprep.subr.bf16.mxu0 0
  %271 = vmatpush1.bf16.msra.mxu0 0
  %272 = vmatprep.subr.bf16.mxu0 0
  %273 = vmatpush1.bf16.msra.mxu0 0
  %274 = vmatprep.subr.bf16.mxu0 0
  %275 = vmatpush1.bf16.msra.mxu0 0
  %276 = vmatprep.subr.bf16.mxu0 0
  %277 = vmatpush1.bf16.msra.mxu0 0
  %278 = vmatprep.subr.bf16.mxu0 0
  %279 = vmatpush1.bf16.msra.mxu0 0
  %280 = vmatprep.subr.bf16.mxu0 0
  %281 = vmatpush1.bf16.msra.mxu0 0
  %282 = vmatprep.subr.bf16.mxu0 0
  %283 = vmatpush1.bf16.msra.mxu0 0
  %284 = vmatprep.subr.bf16.mxu0 %v268
  %285 = vmatpush1.bf16.msra.mxu0 %v265
  %286 = vmatprep.subr.bf16.mxu0 0
  %287 = vmatpush2.bf16.msra.mxu0 0
  %288 = vmatprep.subr.bf16.mxu0 0
  %289 = vmatpush2.bf16.msra.mxu0 0
  %290 = vmatprep.subr.bf16.mxu0 0
  %291 = vmatpush2.bf16.msra.mxu0 0
  %292 = vmatprep.subr.bf16.mxu0 0
  %293 = vmatpush2.bf16.msra.mxu0 0
  %294 = vmatprep.subr.bf16.mxu0 0
  %295 = vmatpush2.bf16.msra.mxu0 0
  %296 = vmatprep.subr.bf16.mxu0 0
  %297 = vmatpush2.bf16.msra.mxu0 0
  %298 = vmatprep.subr.bf16.mxu0 0
  %299 = vmatpush2.bf16.msra.mxu0 0
  %300 = vmatprep.subr.bf16.mxu0 0
  %301 = vmatpush2.bf16.msra.mxu0 0
  %302 = vmatprep.mubr.bf16.mxu0 0
  %303 = vmatmul.mubr.bf16.gmra.mxu0 %v261
  %v304 = vpop.f32.mrf.mxu0
  %v305 = vadd.f32 0.0, %v304
  %v306 = vpop.f32.mrf.mxu0
  %v307 = vadd.f32 0.0, %v306
  %v308 = vpop.f32.mrf.mxu0
  %v309 = vpop.f32.mrf.mxu0
  %310 = vdwg.mxu0
  %v319 = vunpack.c.l.b16 %v201
  %v320 = vunpack.c.l.b16 %v202
  %v321 = vunpack.c.l.b16 %v203
  %v322 = vunpack.c.l.b16 %v204
  %v323 = vunpack.c.l.b16 %v205
  %v324 = vunpack.c.l.b16 %v206
  %v325 = vunpack.c.l.b16 %v207
  %v326 = vunpack.c.l.b16 %v208
  %v327 = vsel %vm236, %v320, %v319
  %v328 = vsel %vm238, %v321, %v327
  %v329 = vsel %vm240, %v322, %v328
  %v330 = vsel %vm242, %v323, %v329
  %v331 = vsel %vm244, %v324, %v330
  %v332 = vsel %vm246, %v325, %v331
  %v333 = vsel %vm248, %v326, %v332
  %v334 = vpack.c.b16 %v333, %v333
  %v337 = vunpack.c.l.b16 %v209
  %v338 = vunpack.c.h.b16 %v209
  %v339 = vunpack.c.l.b16 %v210
  %v340 = vunpack.c.h.b16 %v210
  %v341 = vpack.c.b16 %v339, %v337
  %v342 = vpack.c.b16 %v340, %v338
  %v346 = vsel %vm55, %v334, 0
  %348 = vmatprep.subr.bf16.mxu0 0
  %349 = vmatpush1.bf16.msra.mxu0 0
  %350 = vmatprep.subr.bf16.mxu0 0
  %351 = vmatpush1.bf16.msra.mxu0 0
  %352 = vmatprep.subr.bf16.mxu0 0
  %353 = vmatpush1.bf16.msra.mxu0 0
  %354 = vmatprep.subr.bf16.mxu0 0
  %355 = vmatpush1.bf16.msra.mxu0 0
  %356 = vmatprep.subr.bf16.mxu0 0
  %357 = vmatpush1.bf16.msra.mxu0 0
  %358 = vmatprep.subr.bf16.mxu0 0
  %359 = vmatpush1.bf16.msra.mxu0 0
  %360 = vmatprep.subr.bf16.mxu0 0
  %361 = vmatpush1.bf16.msra.mxu0 0
  %362 = vmatprep.subr.bf16.mxu0 %v342
  %363 = vmatpush1.bf16.msra.mxu0 %v341
  %364 = vmatprep.subr.bf16.mxu0 0
  %365 = vmatpush2.bf16.msra.mxu0 0
  %366 = vmatprep.subr.bf16.mxu0 0
  %367 = vmatpush2.bf16.msra.mxu0 0
  %368 = vmatprep.subr.bf16.mxu0 0
  %369 = vmatpush2.bf16.msra.mxu0 0
  %370 = vmatprep.subr.bf16.mxu0 0
  %371 = vmatpush2.bf16.msra.mxu0 0
  %372 = vmatprep.subr.bf16.mxu0 0
  %373 = vmatpush2.bf16.msra.mxu0 0
  %374 = vmatprep.subr.bf16.mxu0 0
  %375 = vmatpush2.bf16.msra.mxu0 0
  %376 = vmatprep.subr.bf16.mxu0 0
  %377 = vmatpush2.bf16.msra.mxu0 0
  %378 = vmatprep.subr.bf16.mxu0 0
  %379 = vmatpush2.bf16.msra.mxu0 0
  %380 = vmatprep.mubr.bf16.mxu0 0
  %381 = vmatmul.mubr.bf16.gmra.mxu0 %v346
  %v382 = vpop.f32.mrf.mxu0
  %v383 = vadd.f32 %v305, %v382
  %v384 = vpop.f32.mrf.mxu0
  %v385 = vadd.f32 %v307, %v384
  %v386 = vpop.f32.mrf.mxu0
  %v387 = vpop.f32.mrf.mxu0
  %388 = vdwg.mxu0
  %v389 = vld [vmem:[%s4] sm:$0x3]
  %v391 = vlaneseq
  %v392 = vshrl.u32 %v391, 7
  %v393 = vsub.s32 0, %v392
  %v394 = vrot.slane %v389, %v393
  %v395 = vlaneseq
  %v396 = vshrl.u32 %v395, 7
  %v397 = vsub.s32 1, %v396
  %v398 = vrot.slane %v389, %v397
  %v401 = vadd.f32 %v383, %v394
  %v402 = vadd.f32 %v385, %v398
  %v403 = vtanh.pop %v401
  %v404 = vtanh.pop %v402
  %v405 = vpack.c.bf16 %v403, %v403
  %v406 = vpack.c.bf16 %v404, %v404
  %v407 = vld [vmem:[%s5] sm:$0xff]
  %v408 = vld [vmem:[%s5 + $0x8] sm:$0xff]
  %v409 = vld [vmem:[%s5 + $0x10] sm:$0xff]
  %v410 = vld [vmem:[%s5 + $0x18] sm:$0xff]
  %v411 = vld [vmem:[%s5 + $0x20] sm:$0xff]
  %v412 = vld [vmem:[%s5 + $0x28] sm:$0xff]
  %v413 = vld [vmem:[%s5 + $0x30] sm:$0xff]
  %v414 = vld [vmem:[%s5 + $0x38] sm:$0xff]
  %v415 = vld [vmem:[%s5 + $0x40] sm:$0xff]
  %v416 = vld [vmem:[%s5 + $0x48] sm:$0xff]
  %v417 = vld [vmem:[%s5 + $0x50] sm:$0xff]
  %v418 = vld [vmem:[%s5 + $0x58] sm:$0xff]
  %v419 = vld [vmem:[%s5 + $0x60] sm:$0xff]
  %v420 = vld [vmem:[%s5 + $0x68] sm:$0xff]
  %v421 = vld [vmem:[%s5 + $0x70] sm:$0xff]
  %v422 = vld [vmem:[%s5 + $0x78] sm:$0xff]
  %v423 = vld [vmem:[%s5 + $0x80] sm:$0xff]
  %v424 = vld [vmem:[%s5 + $0x88] sm:$0xff]
  %v425 = vld [vmem:[%s5 + $0x90] sm:$0xff]
  %v426 = vld [vmem:[%s5 + $0x98] sm:$0xff]
  %v427 = vld [vmem:[%s5 + $0xa0] sm:$0xff]
  %v428 = vld [vmem:[%s5 + $0xa8] sm:$0xff]
  %v429 = vld [vmem:[%s5 + $0xb0] sm:$0xff]
  %v430 = vld [vmem:[%s5 + $0xb8] sm:$0xff]
  %v431 = vld [vmem:[%s5 + $0xc0] sm:$0xff]
  %v432 = vld [vmem:[%s5 + $0xc8] sm:$0xff]
  %v433 = vld [vmem:[%s5 + $0xd0] sm:$0xff]
  %v434 = vld [vmem:[%s5 + $0xd8] sm:$0xff]
  %v435 = vld [vmem:[%s5 + $0xe0] sm:$0xff]
  %v436 = vld [vmem:[%s5 + $0xe8] sm:$0xff]
  %v437 = vld [vmem:[%s5 + $0xf0] sm:$0xff]
  %v438 = vld [vmem:[%s5 + $0xf8] sm:$0xff]
  %v439 = vld [vmem:[%s6] sm:$0x3]
  %v441 = vlaneseq
  %v442 = vshrl.u32 %v441, 7
  %v443 = vsub.s32 0, %v442
  %v444 = vrot.slane %v439, %v443
  %v445 = vlaneseq
  %v446 = vshrl.u32 %v445, 7
  %v447 = vsub.s32 1, %v446
  %v448 = vrot.slane %v439, %v447
  %v483 = vunpack.c.l.b16 %v407
  %v484 = vunpack.c.h.b16 %v407
  %v485 = vunpack.c.l.b16 %v408
  %v486 = vunpack.c.h.b16 %v408
  %v487 = vunpack.c.l.b16 %v409
  %v488 = vunpack.c.h.b16 %v409
  %v489 = vunpack.c.l.b16 %v410
  %v490 = vunpack.c.h.b16 %v410
  %v491 = vunpack.c.l.b16 %v411
  %v492 = vunpack.c.h.b16 %v411
  %v493 = vunpack.c.l.b16 %v412
  %v494 = vunpack.c.h.b16 %v412
  %v495 = vunpack.c.l.b16 %v413
  %v496 = vunpack.c.h.b16 %v413
  %v497 = vunpack.c.l.b16 %v414
  %v498 = vunpack.c.h.b16 %v414
  %v499 = vunpack.c.l.b16 %v415
  %v500 = vunpack.c.h.b16 %v415
  %v501 = vunpack.c.l.b16 %v416
  %v502 = vunpack.c.h.b16 %v416
  %v503 = vunpack.c.l.b16 %v417
  %v504 = vunpack.c.h.b16 %v417
  %v505 = vunpack.c.l.b16 %v418
  %v506 = vunpack.c.h.b16 %v418
  %v507 = vunpack.c.l.b16 %v419
  %v508 = vunpack.c.h.b16 %v419
  %v509 = vunpack.c.l.b16 %v420
  %v510 = vunpack.c.h.b16 %v420
  %v511 = vunpack.c.l.b16 %v421
  %v512 = vunpack.c.h.b16 %v421
  %v513 = vunpack.c.l.b16 %v422
  %v514 = vunpack.c.h.b16 %v422
  %v515 = vunpack.c.l.b16 %v423
  %v516 = vunpack.c.h.b16 %v423
  %v517 = vunpack.c.l.b16 %v424
  %v518 = vunpack.c.h.b16 %v424
  %v519 = vunpack.c.l.b16 %v425
  %v520 = vunpack.c.h.b16 %v425
  %v521 = vunpack.c.l.b16 %v426
  %v522 = vunpack.c.h.b16 %v426
  %v523 = vunpack.c.l.b16 %v427
  %v524 = vunpack.c.h.b16 %v427
  %v525 = vunpack.c.l.b16 %v428
  %v526 = vunpack.c.h.b16 %v428
  %v527 = vunpack.c.l.b16 %v429
  %v528 = vunpack.c.h.b16 %v429
  %v529 = vunpack.c.l.b16 %v430
  %v530 = vunpack.c.h.b16 %v430
  %v531 = vunpack.c.l.b16 %v431
  %v532 = vunpack.c.h.b16 %v431
  %v533 = vunpack.c.l.b16 %v432
  %v534 = vunpack.c.h.b16 %v432
  %v535 = vunpack.c.l.b16 %v433
  %v536 = vunpack.c.h.b16 %v433
  %v537 = vunpack.c.l.b16 %v434
  %v538 = vunpack.c.h.b16 %v434
  %v539 = vunpack.c.l.b16 %v435
  %v540 = vunpack.c.h.b16 %v435
  %v541 = vunpack.c.l.b16 %v436
  %v542 = vunpack.c.h.b16 %v436
  %v543 = vunpack.c.l.b16 %v437
  %v544 = vunpack.c.h.b16 %v437
  %v545 = vunpack.c.l.b16 %v438
  %v546 = vunpack.c.h.b16 %v438
  %v547 = vpack.c.b16 %v485, %v483
  %v548 = vpack.c.b16 %v486, %v484
  %v549 = vpack.c.b16 %v489, %v487
  %v550 = vpack.c.b16 %v490, %v488
  %v551 = vpack.c.b16 %v493, %v491
  %v552 = vpack.c.b16 %v494, %v492
  %v553 = vpack.c.b16 %v497, %v495
  %v554 = vpack.c.b16 %v498, %v496
  %v555 = vpack.c.b16 %v501, %v499
  %v556 = vpack.c.b16 %v502, %v500
  %v557 = vpack.c.b16 %v505, %v503
  %v558 = vpack.c.b16 %v506, %v504
  %v559 = vpack.c.b16 %v509, %v507
  %v560 = vpack.c.b16 %v510, %v508
  %v561 = vpack.c.b16 %v513, %v511
  %v562 = vpack.c.b16 %v514, %v512
  %v563 = vpack.c.b16 %v517, %v515
  %v564 = vpack.c.b16 %v518, %v516
  %v565 = vpack.c.b16 %v521, %v519
  %v566 = vpack.c.b16 %v522, %v520
  %v567 = vpack.c.b16 %v525, %v523
  %v568 = vpack.c.b16 %v526, %v524
  %v569 = vpack.c.b16 %v529, %v527
  %v570 = vpack.c.b16 %v530, %v528
  %v571 = vpack.c.b16 %v533, %v531
  %v572 = vpack.c.b16 %v534, %v532
  %v573 = vpack.c.b16 %v537, %v535
  %v574 = vpack.c.b16 %v538, %v536
  %v575 = vpack.c.b16 %v541, %v539
  %v576 = vpack.c.b16 %v542, %v540
  %v577 = vpack.c.b16 %v545, %v543
  %v578 = vpack.c.b16 %v546, %v544
  %611 = vmatprep.subr.bf16.mxu0 %v562
  %612 = vmatpush1.bf16.msra.mxu0 %v561
  %613 = vmatprep.subr.bf16.mxu0 %v560
  %614 = vmatpush1.bf16.msra.mxu0 %v559
  %615 = vmatprep.subr.bf16.mxu0 %v558
  %616 = vmatpush1.bf16.msra.mxu0 %v557
  %617 = vmatprep.subr.bf16.mxu0 %v556
  %618 = vmatpush1.bf16.msra.mxu0 %v555
  %619 = vmatprep.subr.bf16.mxu0 %v554
  %620 = vmatpush1.bf16.msra.mxu0 %v553
  %621 = vmatprep.subr.bf16.mxu0 %v552
  %622 = vmatpush1.bf16.msra.mxu0 %v551
  %623 = vmatprep.subr.bf16.mxu0 %v550
  %624 = vmatpush1.bf16.msra.mxu0 %v549
  %625 = vmatprep.subr.bf16.mxu0 %v548
  %626 = vmatpush1.bf16.msra.mxu0 %v547
  %627 = vmatprep.subr.bf16.mxu0 %v578
  %628 = vmatpush2.bf16.msra.mxu0 %v577
  %629 = vmatprep.subr.bf16.mxu0 %v576
  %630 = vmatpush2.bf16.msra.mxu0 %v575
  %631 = vmatprep.subr.bf16.mxu0 %v574
  %632 = vmatpush2.bf16.msra.mxu0 %v573
  %633 = vmatprep.subr.bf16.mxu0 %v572
  %634 = vmatpush2.bf16.msra.mxu0 %v571
  %635 = vmatprep.subr.bf16.mxu0 %v570
  %636 = vmatpush2.bf16.msra.mxu0 %v569
  %637 = vmatprep.subr.bf16.mxu0 %v568
  %638 = vmatpush2.bf16.msra.mxu0 %v567
  %639 = vmatprep.subr.bf16.mxu0 %v566
  %640 = vmatpush2.bf16.msra.mxu0 %v565
  %641 = vmatprep.subr.bf16.mxu0 %v564
  %642 = vmatpush2.bf16.msra.mxu0 %v563
  %643 = vmatprep.mubr.bf16.mxu0 %v406
  %644 = vmatmul.mubr.bf16.gmra.mxu0 %v405
  %v645 = vpop.f32.mrf.mxu0
  %v646 = vadd.f32 %v444, %v645
  %v647 = vpop.f32.mrf.mxu0
  %v648 = vadd.f32 %v448, %v647
  %v649 = vpop.f32.mrf.mxu0
  %v650 = vpop.f32.mrf.mxu0
  %651 = vdwg.mxu0
  %v652 = vmul.f32 %v646, 0.5
  %v653 = vmul.f32 %v648, 0.5
  %v654 = vmul.f32 %v646, 0.70710677
  %v655 = vmul.f32 %v648, 0.70710677
  %v656 = verf.f32.pop %v654
  %v657 = verf.f32.pop %v655
  %v658 = vadd.f32 %v656, 1.0
  %v659 = vadd.f32 %v657, 1.0
  %v660 = vmul.f32 %v652, %v658
  %v661 = vmul.f32 %v653, %v659
  %v662 = vadd.f32 %v660, %v661
  %663 = vadd.xlane.f32.xlu0 %v662
  %v664 = vpop.xlane.xlu0 %663
  %v665 = vmul.f32 %v664, 0.015625
  %v666 = vmul.f32 %v660, %v660
  %v667 = vmul.f32 %v661, %v661
  %v668 = vadd.f32 %v666, %v667
  %669 = vadd.xlane.f32.xlu0 %v668
  %v670 = vpop.xlane.xlu0 %669
  %v671 = vmul.f32 %v670, 0.015625
  %v672 = vmul.f32 %v665, %v665
  %v673 = vsub.f32 %v671, %v672
  %v674 = vmax.f32 %v673, 0.0
  %v675 = vsub.f32 %v660, %v665
  %v676 = vsub.f32 %v661, %v665
  %v677 = vadd.f32 %v674, 1e-12
  %v678 = vrsqrt.pop %v677
  %v679 = vmul.f32 %v675, %v678
  %v680 = vmul.f32 %v676, %v678
  %v681 = vld [vmem:[%s7] sm:$0x3]
  %v683 = vlaneseq
  %v684 = vshrl.u32 %v683, 7
  %v685 = vsub.s32 0, %v684
  %v686 = vrot.slane %v681, %v685
  %v687 = vlaneseq
  %v688 = vshrl.u32 %v687, 7
  %v689 = vsub.s32 1, %v688
  %v690 = vrot.slane %v681, %v689
  %v693 = vmul.f32 %v679, %v686
  %v694 = vmul.f32 %v680, %v690
  %v695 = vld [vmem:[%s8] sm:$0x3]
  %v697 = vlaneseq
  %v698 = vshrl.u32 %v697, 7
  %v699 = vsub.s32 0, %v698
  %v700 = vrot.slane %v695, %v699
  %v701 = vlaneseq
  %v702 = vshrl.u32 %v701, 7
  %v703 = vsub.s32 1, %v702
  %v704 = vrot.slane %v695, %v703
  %v707 = vadd.f32 %v693, %v700
  %v708 = vadd.f32 %v694, %v704
  %v709 = vpack.c.bf16 %v707, %v707
  %v710 = vpack.c.bf16 %v708, %v708
  %v711 = vld [vmem:[%s9] sm:$0xff]
  %v712 = vld [vmem:[%s9 + $0x8] sm:$0xff]
  %v713 = vld [vmem:[%s9 + $0x10] sm:$0xff]
  %v714 = vld [vmem:[%s9 + $0x18] sm:$0xff]
  %v715 = vld [vmem:[%s9 + $0x20] sm:$0xff]
  %v716 = vld [vmem:[%s9 + $0x28] sm:$0xff]
  %v717 = vld [vmem:[%s9 + $0x30] sm:$0xff]
  %v718 = vld [vmem:[%s9 + $0x38] sm:$0xff]
  %v719 = vld [vmem:[%s9 + $0x40] sm:$0xff]
  %v720 = vld [vmem:[%s9 + $0x48] sm:$0xff]
  %v721 = vld [vmem:[%s9 + $0x50] sm:$0xff]
  %v722 = vld [vmem:[%s9 + $0x58] sm:$0xff]
  %v723 = vld [vmem:[%s9 + $0x60] sm:$0xff]
  %v724 = vld [vmem:[%s9 + $0x68] sm:$0xff]
  %v725 = vld [vmem:[%s9 + $0x70] sm:$0xff]
  %v726 = vld [vmem:[%s9 + $0x78] sm:$0xff]
  %v727 = vld [vmem:[%s9 + $0x80] sm:$0xff]
  %v728 = vld [vmem:[%s9 + $0x88] sm:$0xff]
  %v729 = vld [vmem:[%s9 + $0x90] sm:$0xff]
  %v730 = vld [vmem:[%s9 + $0x98] sm:$0xff]
  %v731 = vld [vmem:[%s9 + $0xa0] sm:$0xff]
  %v732 = vld [vmem:[%s9 + $0xa8] sm:$0xff]
  %v733 = vld [vmem:[%s9 + $0xb0] sm:$0xff]
  %v734 = vld [vmem:[%s9 + $0xb8] sm:$0xff]
  %v735 = vld [vmem:[%s9 + $0xc0] sm:$0xff]
  %v736 = vld [vmem:[%s9 + $0xc8] sm:$0xff]
  %v737 = vld [vmem:[%s9 + $0xd0] sm:$0xff]
  %v738 = vld [vmem:[%s9 + $0xd8] sm:$0xff]
  %v739 = vld [vmem:[%s9 + $0xe0] sm:$0xff]
  %v740 = vld [vmem:[%s9 + $0xe8] sm:$0xff]
  %v741 = vld [vmem:[%s9 + $0xf0] sm:$0xff]
  %v742 = vld [vmem:[%s9 + $0xf8] sm:$0xff]
  %v743 = vld [vmem:[%s10] sm:$0x3]
  %v745 = vlaneseq
  %v746 = vshrl.u32 %v745, 7
  %v747 = vsub.s32 0, %v746
  %v748 = vrot.slane %v743, %v747
  %v749 = vlaneseq
  %v750 = vshrl.u32 %v749, 7
  %v751 = vsub.s32 1, %v750
  %v752 = vrot.slane %v743, %v751
  %v787 = vunpack.c.l.b16 %v711
  %v788 = vunpack.c.h.b16 %v711
  %v789 = vunpack.c.l.b16 %v712
  %v790 = vunpack.c.h.b16 %v712
  %v791 = vunpack.c.l.b16 %v713
  %v792 = vunpack.c.h.b16 %v713
  %v793 = vunpack.c.l.b16 %v714
  %v794 = vunpack.c.h.b16 %v714
  %v795 = vunpack.c.l.b16 %v715
  %v796 = vunpack.c.h.b16 %v715
  %v797 = vunpack.c.l.b16 %v716
  %v798 = vunpack.c.h.b16 %v716
  %v799 = vunpack.c.l.b16 %v717
  %v800 = vunpack.c.h.b16 %v717
  %v801 = vunpack.c.l.b16 %v718
  %v802 = vunpack.c.h.b16 %v718
  %v803 = vunpack.c.l.b16 %v719
  %v804 = vunpack.c.h.b16 %v719
  %v805 = vunpack.c.l.b16 %v720
  %v806 = vunpack.c.h.b16 %v720
  %v807 = vunpack.c.l.b16 %v721
  %v808 = vunpack.c.h.b16 %v721
  %v809 = vunpack.c.l.b16 %v722
  %v810 = vunpack.c.h.b16 %v722
  %v811 = vunpack.c.l.b16 %v723
  %v812 = vunpack.c.h.b16 %v723
  %v813 = vunpack.c.l.b16 %v724
  %v814 = vunpack.c.h.b16 %v724
  %v815 = vunpack.c.l.b16 %v725
  %v816 = vunpack.c.h.b16 %v725
  %v817 = vunpack.c.l.b16 %v726
  %v818 = vunpack.c.h.b16 %v726
  %v819 = vunpack.c.l.b16 %v727
  %v820 = vunpack.c.h.b16 %v727
  %v821 = vunpack.c.l.b16 %v728
  %v822 = vunpack.c.h.b16 %v728
  %v823 = vunpack.c.l.b16 %v729
  %v824 = vunpack.c.h.b16 %v729
  %v825 = vunpack.c.l.b16 %v730
  %v826 = vunpack.c.h.b16 %v730
  %v827 = vunpack.c.l.b16 %v731
  %v828 = vunpack.c.h.b16 %v731
  %v829 = vunpack.c.l.b16 %v732
  %v830 = vunpack.c.h.b16 %v732
  %v831 = vunpack.c.l.b16 %v733
  %v832 = vunpack.c.h.b16 %v733
  %v833 = vunpack.c.l.b16 %v734
  %v834 = vunpack.c.h.b16 %v734
  %v835 = vunpack.c.l.b16 %v735
  %v836 = vunpack.c.h.b16 %v735
  %v837 = vunpack.c.l.b16 %v736
  %v838 = vunpack.c.h.b16 %v736
  %v839 = vunpack.c.l.b16 %v737
  %v840 = vunpack.c.h.b16 %v737
  %v841 = vunpack.c.l.b16 %v738
  %v842 = vunpack.c.h.b16 %v738
  %v843 = vunpack.c.l.b16 %v739
  %v844 = vunpack.c.h.b16 %v739
  %v845 = vunpack.c.l.b16 %v740
  %v846 = vunpack.c.h.b16 %v740
  %v847 = vunpack.c.l.b16 %v741
  %v848 = vunpack.c.h.b16 %v741
  %v849 = vunpack.c.l.b16 %v742
  %v850 = vunpack.c.h.b16 %v742
  %v851 = vpack.c.b16 %v789, %v787
  %v852 = vpack.c.b16 %v790, %v788
  %v853 = vpack.c.b16 %v793, %v791
  %v854 = vpack.c.b16 %v794, %v792
  %v855 = vpack.c.b16 %v797, %v795
  %v856 = vpack.c.b16 %v798, %v796
  %v857 = vpack.c.b16 %v801, %v799
  %v858 = vpack.c.b16 %v802, %v800
  %v859 = vpack.c.b16 %v805, %v803
  %v860 = vpack.c.b16 %v806, %v804
  %v861 = vpack.c.b16 %v809, %v807
  %v862 = vpack.c.b16 %v810, %v808
  %v863 = vpack.c.b16 %v813, %v811
  %v864 = vpack.c.b16 %v814, %v812
  %v865 = vpack.c.b16 %v817, %v815
  %v866 = vpack.c.b16 %v818, %v816
  %v867 = vpack.c.b16 %v821, %v819
  %v868 = vpack.c.b16 %v822, %v820
  %v869 = vpack.c.b16 %v825, %v823
  %v870 = vpack.c.b16 %v826, %v824
  %v871 = vpack.c.b16 %v829, %v827
  %v872 = vpack.c.b16 %v830, %v828
  %v873 = vpack.c.b16 %v833, %v831
  %v874 = vpack.c.b16 %v834, %v832
  %v875 = vpack.c.b16 %v837, %v835
  %v876 = vpack.c.b16 %v838, %v836
  %v877 = vpack.c.b16 %v841, %v839
  %v878 = vpack.c.b16 %v842, %v840
  %v879 = vpack.c.b16 %v845, %v843
  %v880 = vpack.c.b16 %v846, %v844
  %v881 = vpack.c.b16 %v849, %v847
  %v882 = vpack.c.b16 %v850, %v848
  %915 = vmatprep.subr.bf16.mxu0 %v866
  %916 = vmatpush1.bf16.msra.mxu0 %v865
  %917 = vmatprep.subr.bf16.mxu0 %v864
  %918 = vmatpush1.bf16.msra.mxu0 %v863
  %919 = vmatprep.subr.bf16.mxu0 %v862
  %920 = vmatpush1.bf16.msra.mxu0 %v861
  %921 = vmatprep.subr.bf16.mxu0 %v860
  %922 = vmatpush1.bf16.msra.mxu0 %v859
  %923 = vmatprep.subr.bf16.mxu0 %v858
  %924 = vmatpush1.bf16.msra.mxu0 %v857
  %925 = vmatprep.subr.bf16.mxu0 %v856
  %926 = vmatpush1.bf16.msra.mxu0 %v855
  %927 = vmatprep.subr.bf16.mxu0 %v854
  %928 = vmatpush1.bf16.msra.mxu0 %v853
  %929 = vmatprep.subr.bf16.mxu0 %v852
  %930 = vmatpush1.bf16.msra.mxu0 %v851
  %931 = vmatprep.subr.bf16.mxu0 %v882
  %932 = vmatpush2.bf16.msra.mxu0 %v881
  %933 = vmatprep.subr.bf16.mxu0 %v880
  %934 = vmatpush2.bf16.msra.mxu0 %v879
  %935 = vmatprep.subr.bf16.mxu0 %v878
  %936 = vmatpush2.bf16.msra.mxu0 %v877
  %937 = vmatprep.subr.bf16.mxu0 %v876
  %938 = vmatpush2.bf16.msra.mxu0 %v875
  %939 = vmatprep.subr.bf16.mxu0 %v874
  %940 = vmatpush2.bf16.msra.mxu0 %v873
  %941 = vmatprep.subr.bf16.mxu0 %v872
  %942 = vmatpush2.bf16.msra.mxu0 %v871
  %943 = vmatprep.subr.bf16.mxu0 %v870
  %944 = vmatpush2.bf16.msra.mxu0 %v869
  %945 = vmatprep.subr.bf16.mxu0 %v868
  %946 = vmatpush2.bf16.msra.mxu0 %v867
  %947 = vmatprep.mubr.bf16.mxu0 %v710
  %948 = vmatmul.mubr.bf16.gmra.mxu0 %v709
  %v949 = vpop.f32.mrf.mxu0
  %v950 = vadd.f32 %v748, %v949
  %v951 = vpop.f32.mrf.mxu0
  %v952 = vadd.f32 %v752, %v951
  %v953 = vpop.f32.mrf.mxu0
  %v954 = vpop.f32.mrf.mxu0
  %955 = vdwg.mxu0
  %956 = vst [vmem:[%s11] sm:$0xff] %v950
  %957 = vst [vmem:[%s11 + $0x8] sm:$0xff] %v952
  // Predicated region
  $region46: #{_gqa_forward_impl.1} parent=0 // pred_check
    _
  $region47: #{_gqa_forward_impl.1} parent=0 // pred_check_branch
    %959 = sbr.rel (0) target = $region49
  $region48: #{_gqa_forward_impl.1} parent=0 // pred_region
    _
  $region49: #{_gqa_forward_impl.1} parent=0 // pred_fallthru
    _
  // Predicated region
  $region50: #{_gqa_forward_impl.1} parent=0 // pred_check
    _
  $region51: #{_gqa_forward_impl.1} parent=0 // pred_check_branch
    %961 = sbr.rel (0) target = $region53
  $region52: #{_gqa_forward_impl.1} parent=0 // pred_region
    _
  $region53: #{_gqa_forward_impl.1} parent=0 // pred_fallthru
    _

</llo_original>
